<compile_context>
chip_gen: v7x
topology: tpu7x:2x2x1
jax: 0.10.0
libtpu: 0.0.40
codegen_flags: <defaults>
</compile_context>

<pallas_src>
import functools
import math

import jax
import jax.numpy as jnp
from jax import lax
from jax.experimental import pallas as pl
from jax.experimental.pallas import tpu as pltpu

LN_EPS = 1e-5  # nn.LayerNorm default


# Shared numerics helpers (used by both the kernel and the pure-JAX reference
# so the formulas match bit-for-bit up to matmul rounding).
def _layer_norm(v, gamma, beta):
    mu = jnp.mean(v, axis=-1, keepdims=True)
    var = jnp.mean((v - mu) ** 2, axis=-1, keepdims=True)
    return (v - mu) * lax.rsqrt(var + LN_EPS) * gamma + beta


def _softmax_last(s):
    m = jnp.max(s, axis=-1, keepdims=True)
    e = jnp.exp(s - m)
    return e / jnp.sum(e, axis=-1, keepdims=True)


# ----------------------------------------------------------------------------
# Fused kernel: one batch element per grid step, whole (S, C) tile in VMEM.
# ----------------------------------------------------------------------------
def transformer_layer_kernel(
    x_ref,
    g1_ref, b1_ref,                      # LayerNorm1
    wq_ref, wk_ref, wv_ref,              # q/k/v Linear (no bias), stored as W.T
    wiq_ref, wik_ref, wiv_ref,           # MHA in_proj weights (split), W.T
    biq_ref, bik_ref, biv_ref,           # MHA in_proj biases
    wo_ref, bo_ref,                      # MHA out_proj (W.T, bias)
    g2_ref, b2_ref,                      # LayerNorm2
    w1_ref, w2_ref,                      # fc1.T (C,4C), fc2.T (4C,C)
    o_ref,
    *, num_heads):
    x = x_ref[0]                         # (S, C)
    S, C = x.shape
    D = C // num_heads
    scale = 1.0 / math.sqrt(D)

    # ---- LayerNorm 1 ----
    xn = _layer_norm(x, g1_ref[...], b1_ref[...])

    # ---- q/k/v Linear (no bias) then MHA in-projections (with bias) ----
    q = jnp.dot(xn, wq_ref[...], preferred_element_type=jnp.float32)
    k = jnp.dot(xn, wk_ref[...], preferred_element_type=jnp.float32)
    v = jnp.dot(xn, wv_ref[...], preferred_element_type=jnp.float32)
    q = jnp.dot(q, wiq_ref[...], preferred_element_type=jnp.float32) + biq_ref[...]
    k = jnp.dot(k, wik_ref[...], preferred_element_type=jnp.float32) + bik_ref[...]
    v = jnp.dot(v, wiv_ref[...], preferred_element_type=jnp.float32) + biv_ref[...]

    # ---- multi-head scaled dot-product attention + fused out-projection ----
    # concat_h(o_h) @ Wo.T == sum_h o_h @ Wo.T[hD:(h+1)D, :]  -> no concat needed.
    wo = wo_ref[...]                     # (C, C)
    acc = jnp.zeros((S, C), jnp.float32)
    for h in range(num_heads):           # static unrolled loop (tiny head count)
        lo = h * D
        qh = q[:, lo:lo + D]
        kh = k[:, lo:lo + D]
        vh = v[:, lo:lo + D]
        s_ = lax.dot_general(qh, kh, (((1,), (1,)), ((), ())),
                             preferred_element_type=jnp.float32) * scale
        p = _softmax_last(s_)            # (S, S)
        oh = jnp.dot(p, vh, preferred_element_type=jnp.float32)   # (S, D)
        acc = acc + jnp.dot(oh, wo[lo:lo + D, :],
                            preferred_element_type=jnp.float32)
    attn = acc + bo_ref[...]

    # ---- residual 1 (dropout = identity) ----
    x1 = attn + x

    # ---- LayerNorm 2 + FFN + residual 2 ----
    x1n = _layer_norm(x1, g2_ref[...], b2_ref[...])
    h1 = jnp.maximum(jnp.dot(x1n, w1_ref[...],
                             preferred_element_type=jnp.float32), 0.0)
    ffn = jnp.dot(h1, w2_ref[...], preferred_element_type=jnp.float32)

    o_ref[0] = (x1 + ffn).astype(o_ref.dtype)


# ----------------------------------------------------------------------------
# Wrapper
# ----------------------------------------------------------------------------
def transformer_layer_pallas(x, params):
    """x: (S, B, C)  — seq-first layout as expected by nn.MultiheadAttention."""
    S, B, C = x.shape
    H = params["num_heads"]
    Cf = params["w1_t"].shape[1]         # 4 * C

    # Batch-major, channel-last (lane-dense) layout for the kernel.
    xb = jnp.transpose(x, (1, 0, 2))     # (B, S, C)

    def w_spec(shape):
        return pl.BlockSpec(shape, lambda b, _n=len(shape): (0,) * _n)

    out = pl.pallas_call(
        functools.partial(transformer_layer_kernel, num_heads=H),
        out_shape=jax.ShapeDtypeStruct((B, S, C), jnp.float32),
        grid=(B,),
        in_specs=[
            pl.BlockSpec((1, S, C), lambda b: (b, 0, 0)),        # x
            w_spec((1, C)), w_spec((1, C)),                      # ln1 gamma/beta
            w_spec((C, C)), w_spec((C, C)), w_spec((C, C)),      # q/k/v W.T
            w_spec((C, C)), w_spec((C, C)), w_spec((C, C)),      # in_proj W.T
            w_spec((1, C)), w_spec((1, C)), w_spec((1, C)),      # in_proj biases
            w_spec((C, C)), w_spec((1, C)),                      # out_proj W.T, b
            w_spec((1, C)), w_spec((1, C)),                      # ln2 gamma/beta
            w_spec((C, Cf)), w_spec((Cf, C)),                    # fc1.T, fc2.T
        ],
        out_specs=pl.BlockSpec((1, S, C), lambda b: (b, 0, 0)),
        compiler_params=pltpu.CompilerParams(
            dimension_semantics=("parallel",)),                  # megacore over batch
    )(xb,
      params["g1"], params["b1"],
      params["wq_t"], params["wk_t"], params["wv_t"],
      params["wiq_t"], params["wik_t"], params["wiv_t"],
      params["biq"], params["bik"], params["biv"],
      params["wo_t"], params["bo"],
      params["g2"], params["b2"],
      params["w1_t"], params["w2_t"])

    return jnp.transpose(out, (1, 0, 2))  # back to (S, B, C)


# ----------------------------------------------------------------------------
# Pure-JAX reference (mirrors the PyTorch forward in eval mode exactly)
# ----------------------------------------------------------------------------
def transformer_layer_ref(x, params):
    S, B, C = x.shape
    H = params["num_heads"]
    D = C // H
    scale = 1.0 / math.sqrt(D)

    xn = _layer_norm(x, params["g1"], params["b1"])
    q = xn @ params["wq_t"] @ params["wiq_t"] + params["biq"]
    k = xn @ params["wk_t"] @ params["wik_t"] + params["bik"]
    v = xn @ params["wv_t"] @ params["wiv_t"] + params["biv"]

    def split_heads(t):                  # (S,B,C) -> (B,H,S,D)
        return t.reshape(S, B, H, D).transpose(1, 2, 0, 3)

    qh, kh, vh = split_heads(q), split_heads(k), split_heads(v)
    s_ = jnp.einsum("bhsd,bhtd->bhst", qh, kh) * scale
    p = _softmax_last(s_)
    oh = jnp.einsum("bhst,bhtd->bhsd", p, vh)
    o = oh.transpose(2, 0, 1, 3).reshape(S, B, C)
    attn = o @ params["wo_t"] + params["bo"]

    x1 = attn + x
    x1n = _layer_norm(x1, params["g2"], params["b2"])
    ffn = jnp.maximum(x1n @ params["w1_t"], 0.0) @ params["w2_t"]
    return x1 + ffn


if __name__ == "__main__":
    S, B, C, H = 8, 2, 32, 4             # seq=8, batch=2, c=32, num_heads=4
    Cf = 4 * C

    key = jax.random.PRNGKey(0)
    ks = jax.random.split(key, 18)

    def w(k, shape, s=0.2):
        return jax.random.normal(k, shape, jnp.float32) * s

    params = {
        "num_heads": H,
        "g1": 1.0 + 0.1 * jax.random.normal(ks[0], (1, C), jnp.float32),
        "b1": 0.1 * jax.random.normal(ks[1], (1, C), jnp.float32),
        "wq_t": w(ks[2], (C, C)),        # nn.Linear(c,c,bias=False).weight.T
        "wk_t": w(ks[3], (C, C)),
        "wv_t": w(ks[4], (C, C)),
        "wiq_t": w(ks[5], (C, C)),       # MHA in_proj_weight[:C].T
        "wik_t": w(ks[6], (C, C)),       # MHA in_proj_weight[C:2C].T
        "wiv_t": w(ks[7], (C, C)),       # MHA in_proj_weight[2C:].T
        "biq": 0.1 * jax.random.normal(ks[8], (1, C), jnp.float32),
        "bik": 0.1 * jax.random.normal(ks[9], (1, C), jnp.float32),
        "biv": 0.1 * jax.random.normal(ks[10], (1, C), jnp.float32),
        "wo_t": w(ks[11], (C, C)),       # MHA out_proj.weight.T
        "bo": 0.1 * jax.random.normal(ks[12], (1, C), jnp.float32),
        "g2": 1.0 + 0.1 * jax.random.normal(ks[13], (1, C), jnp.float32),
        "b2": 0.1 * jax.random.normal(ks[14], (1, C), jnp.float32),
        "w1_t": w(ks[15], (C, Cf)),      # fc1.weight.T  (c -> 4c)
        "w2_t": w(ks[16], (Cf, C)),      # fc2.weight.T  (4c -> c)
    }

    x = jax.random.normal(ks[17], (S, B, C), jnp.float32)

    out = transformer_layer_pallas(x, params)
    out = jax.block_until_ready(out)

    with jax.default_matmul_precision("highest"):
        ref = transformer_layer_ref(x, params)

    assert out.shape == (S, B, C)
    max_err = jnp.max(jnp.abs(out - ref))
    assert jnp.allclose(out, ref, atol=1e-3, rtol=1e-3), f"max abs err {max_err}"

    print("KERNEL_OK")
</pallas_src>

<mosaic_0001>
module attributes {stable_mosaic.version = 11 : i64} {
  func.func @transformer_layer_kernel(%arg0: i32, %arg1: memref<1x8x32xf32, #tpu.memory_space<vmem>>, %arg2: memref<1x32xf32, #tpu.memory_space<vmem>>, %arg3: memref<1x32xf32, #tpu.memory_space<vmem>>, %arg4: memref<32x32xf32, #tpu.memory_space<vmem>>, %arg5: memref<32x32xf32, #tpu.memory_space<vmem>>, %arg6: memref<32x32xf32, #tpu.memory_space<vmem>>, %arg7: memref<32x32xf32, #tpu.memory_space<vmem>>, %arg8: memref<32x32xf32, #tpu.memory_space<vmem>>, %arg9: memref<32x32xf32, #tpu.memory_space<vmem>>, %arg10: memref<1x32xf32, #tpu.memory_space<vmem>>, %arg11: memref<1x32xf32, #tpu.memory_space<vmem>>, %arg12: memref<1x32xf32, #tpu.memory_space<vmem>>, %arg13: memref<32x32xf32, #tpu.memory_space<vmem>>, %arg14: memref<1x32xf32, #tpu.memory_space<vmem>>, %arg15: memref<1x32xf32, #tpu.memory_space<vmem>>, %arg16: memref<1x32xf32, #tpu.memory_space<vmem>>, %arg17: memref<32x128xf32, #tpu.memory_space<vmem>>, %arg18: memref<128x32xf32, #tpu.memory_space<vmem>>, %arg19: memref<1x8x32xf32, #tpu.memory_space<vmem>>) attributes {dimension_semantics = [#tpu.dimension_semantics<parallel>], iteration_bounds = array<i64: 2>, scalar_prefetch = 0 : i64, scratch_operands = 0 : i64, tpu.core_type = #tpu.core_type<tc>, window_params = [{transform_indices = @transform_0, window_bounds = array<i64: 1, 8, 32>}, {pipeline_mode = #tpu.pipeline_mode<synchronous>, transform_indices = @transform_1, window_bounds = array<i64: 1, 32>}, {pipeline_mode = #tpu.pipeline_mode<synchronous>, transform_indices = @transform_2, window_bounds = array<i64: 1, 32>}, {pipeline_mode = #tpu.pipeline_mode<synchronous>, transform_indices = @transform_3, window_bounds = array<i64: 32, 32>}, {pipeline_mode = #tpu.pipeline_mode<synchronous>, transform_indices = @transform_4, window_bounds = array<i64: 32, 32>}, {pipeline_mode = #tpu.pipeline_mode<synchronous>, transform_indices = @transform_5, window_bounds = array<i64: 32, 32>}, {pipeline_mode = #tpu.pipeline_mode<synchronous>, transform_indices = @transform_6, window_bounds = array<i64: 32, 32>}, {pipeline_mode = #tpu.pipeline_mode<synchronous>, transform_indices = @transform_7, window_bounds = array<i64: 32, 32>}, {pipeline_mode = #tpu.pipeline_mode<synchronous>, transform_indices = @transform_8, window_bounds = array<i64: 32, 32>}, {pipeline_mode = #tpu.pipeline_mode<synchronous>, transform_indices = @transform_9, window_bounds = array<i64: 1, 32>}, {pipeline_mode = #tpu.pipeline_mode<synchronous>, transform_indices = @transform_10, window_bounds = array<i64: 1, 32>}, {pipeline_mode = #tpu.pipeline_mode<synchronous>, transform_indices = @transform_11, window_bounds = array<i64: 1, 32>}, {pipeline_mode = #tpu.pipeline_mode<synchronous>, transform_indices = @transform_12, window_bounds = array<i64: 32, 32>}, {pipeline_mode = #tpu.pipeline_mode<synchronous>, transform_indices = @transform_13, window_bounds = array<i64: 1, 32>}, {pipeline_mode = #tpu.pipeline_mode<synchronous>, transform_indices = @transform_14, window_bounds = array<i64: 1, 32>}, {pipeline_mode = #tpu.pipeline_mode<synchronous>, transform_indices = @transform_15, window_bounds = array<i64: 1, 32>}, {pipeline_mode = #tpu.pipeline_mode<synchronous>, transform_indices = @transform_16, window_bounds = array<i64: 32, 128>}, {pipeline_mode = #tpu.pipeline_mode<synchronous>, transform_indices = @transform_17, window_bounds = array<i64: 128, 32>}, {transform_indices = @transform_18, window_bounds = array<i64: 1, 8, 32>}]} {
    %c0 = arith.constant 0 : index
    %c0_0 = arith.constant 0 : index
    %c0_1 = arith.constant 0 : index
    %0 = vector.load %arg1[%c0, %c0_0, %c0_1] : memref<1x8x32xf32, #tpu.memory_space<vmem>>, vector<1x8x32xf32>
    %1 = vector.shape_cast %0 : vector<1x8x32xf32> to vector<8x32xf32>
    %c0_2 = arith.constant 0 : index
    %c0_3 = arith.constant 0 : index
    %2 = vector.load %arg2[%c0_2, %c0_3] : memref<1x32xf32, #tpu.memory_space<vmem>>, vector<1x32xf32>
    %c0_4 = arith.constant 0 : index
    %c0_5 = arith.constant 0 : index
    %3 = vector.load %arg3[%c0_4, %c0_5] : memref<1x32xf32, #tpu.memory_space<vmem>>, vector<1x32xf32>
    %cst = arith.constant dense<0.000000e+00> : vector<8xf32>
    %4 = vector.multi_reduction <add>, %1, %cst [1] : vector<8x32xf32> to vector<8xf32>
    %5 = vector.shape_cast %4 : vector<8xf32> to vector<8x1xf32>
    %cst_6 = arith.constant 3.200000e+01 : f32
    %6 = vector.broadcast %cst_6 : f32 to vector<8x1xf32>
    %7 = arith.divf %5, %6 : vector<8x1xf32>
    %8 = vector.broadcast %7 : vector<8x1xf32> to vector<8x32xf32>
    %9 = arith.subf %1, %8 : vector<8x32xf32>
    %10 = arith.mulf %9, %9 : vector<8x32xf32>
    %cst_7 = arith.constant dense<0.000000e+00> : vector<8xf32>
    %11 = vector.multi_reduction <add>, %10, %cst_7 [1] : vector<8x32xf32> to vector<8xf32>
    %12 = vector.shape_cast %11 : vector<8xf32> to vector<8x1xf32>
    %cst_8 = arith.constant 3.200000e+01 : f32
    %13 = vector.broadcast %cst_8 : f32 to vector<8x1xf32>
    %14 = arith.divf %12, %13 : vector<8x1xf32>
    %15 = vector.broadcast %7 : vector<8x1xf32> to vector<8x32xf32>
    %16 = arith.subf %1, %15 : vector<8x32xf32>
    %cst_9 = arith.constant 9.99999974E-6 : f32
    %17 = vector.broadcast %cst_9 : f32 to vector<8x1xf32>
    %18 = arith.addf %14, %17 : vector<8x1xf32>
    %19 = math.rsqrt %18 : vector<8x1xf32>
    %20 = vector.broadcast %19 : vector<8x1xf32> to vector<8x32xf32>
    %21 = arith.mulf %16, %20 : vector<8x32xf32>
    %22 = vector.broadcast %2 : vector<1x32xf32> to vector<8x32xf32>
    %23 = arith.mulf %21, %22 : vector<8x32xf32>
    %24 = vector.broadcast %3 : vector<1x32xf32> to vector<8x32xf32>
    %25 = arith.addf %23, %24 : vector<8x32xf32>
    %c0_10 = arith.constant 0 : index
    %c0_11 = arith.constant 0 : index
    %26 = vector.load %arg4[%c0_10, %c0_11] : memref<32x32xf32, #tpu.memory_space<vmem>>, vector<32x32xf32>
    %cst_12 = arith.constant dense<0.000000e+00> : vector<8x32xf32>
    %27 = tpu.matmul %25, %26, %cst_12 {dimension_numbers = #tpu.dot_dimension_numbers<[1], [0], [0], [1], [0, 0, 1, 1], [], []>} : vector<8x32xf32>, vector<32x32xf32>, vector<8x32xf32> -> vector<8x32xf32>
    %c0_13 = arith.constant 0 : index
    %c0_14 = arith.constant 0 : index
    %28 = vector.load %arg5[%c0_13, %c0_14] : memref<32x32xf32, #tpu.memory_space<vmem>>, vector<32x32xf32>
    %cst_15 = arith.constant dense<0.000000e+00> : vector<8x32xf32>
    %29 = tpu.matmul %25, %28, %cst_15 {dimension_numbers = #tpu.dot_dimension_numbers<[1], [0], [0], [1], [0, 0, 1, 1], [], []>} : vector<8x32xf32>, vector<32x32xf32>, vector<8x32xf32> -> vector<8x32xf32>
    %c0_16 = arith.constant 0 : index
    %c0_17 = arith.constant 0 : index
    %30 = vector.load %arg6[%c0_16, %c0_17] : memref<32x32xf32, #tpu.memory_space<vmem>>, vector<32x32xf32>
    %cst_18 = arith.constant dense<0.000000e+00> : vector<8x32xf32>
    %31 = tpu.matmul %25, %30, %cst_18 {dimension_numbers = #tpu.dot_dimension_numbers<[1], [0], [0], [1], [0, 0, 1, 1], [], []>} : vector<8x32xf32>, vector<32x32xf32>, vector<8x32xf32> -> vector<8x32xf32>
    %c0_19 = arith.constant 0 : index
    %c0_20 = arith.constant 0 : index
    %32 = vector.load %arg7[%c0_19, %c0_20] : memref<32x32xf32, #tpu.memory_space<vmem>>, vector<32x32xf32>
    %cst_21 = arith.constant dense<0.000000e+00> : vector<8x32xf32>
    %33 = tpu.matmul %27, %32, %cst_21 {dimension_numbers = #tpu.dot_dimension_numbers<[1], [0], [0], [1], [0, 0, 1, 1], [], []>} : vector<8x32xf32>, vector<32x32xf32>, vector<8x32xf32> -> vector<8x32xf32>
    %c0_22 = arith.constant 0 : index
    %c0_23 = arith.constant 0 : index
    %34 = vector.load %arg10[%c0_22, %c0_23] : memref<1x32xf32, #tpu.memory_space<vmem>>, vector<1x32xf32>
    %35 = vector.broadcast %34 : vector<1x32xf32> to vector<8x32xf32>
    %36 = arith.addf %33, %35 : vector<8x32xf32>
    %c0_24 = arith.constant 0 : index
    %c0_25 = arith.constant 0 : index
    %37 = vector.load %arg8[%c0_24, %c0_25] : memref<32x32xf32, #tpu.memory_space<vmem>>, vector<32x32xf32>
    %cst_26 = arith.constant dense<0.000000e+00> : vector<8x32xf32>
    %38 = tpu.matmul %29, %37, %cst_26 {dimension_numbers = #tpu.dot_dimension_numbers<[1], [0], [0], [1], [0, 0, 1, 1], [], []>} : vector<8x32xf32>, vector<32x32xf32>, vector<8x32xf32> -> vector<8x32xf32>
    %c0_27 = arith.constant 0 : index
    %c0_28 = arith.constant 0 : index
    %39 = vector.load %arg11[%c0_27, %c0_28] : memref<1x32xf32, #tpu.memory_space<vmem>>, vector<1x32xf32>
    %40 = vector.broadcast %39 : vector<1x32xf32> to vector<8x32xf32>
    %41 = arith.addf %38, %40 : vector<8x32xf32>
    %c0_29 = arith.constant 0 : index
    %c0_30 = arith.constant 0 : index
    %42 = vector.load %arg9[%c0_29, %c0_30] : memref<32x32xf32, #tpu.memory_space<vmem>>, vector<32x32xf32>
    %cst_31 = arith.constant dense<0.000000e+00> : vector<8x32xf32>
    %43 = tpu.matmul %31, %42, %cst_31 {dimension_numbers = #tpu.dot_dimension_numbers<[1], [0], [0], [1], [0, 0, 1, 1], [], []>} : vector<8x32xf32>, vector<32x32xf32>, vector<8x32xf32> -> vector<8x32xf32>
    %c0_32 = arith.constant 0 : index
    %c0_33 = arith.constant 0 : index
    %44 = vector.load %arg12[%c0_32, %c0_33] : memref<1x32xf32, #tpu.memory_space<vmem>>, vector<1x32xf32>
    %45 = vector.broadcast %44 : vector<1x32xf32> to vector<8x32xf32>
    %46 = arith.addf %43, %45 : vector<8x32xf32>
    %c0_34 = arith.constant 0 : index
    %c0_35 = arith.constant 0 : index
    %47 = vector.load %arg13[%c0_34, %c0_35] : memref<32x32xf32, #tpu.memory_space<vmem>>, vector<32x32xf32>
    %cst_36 = arith.constant 0.000000e+00 : f32
    %48 = vector.broadcast %cst_36 : f32 to vector<8x32xf32>
    %49 = vector.extract_strided_slice %36 {offsets = [0, 0], sizes = [8, 8], strides = [1, 1]} : vector<8x32xf32> to vector<8x8xf32>
    %50 = vector.extract_strided_slice %41 {offsets = [0, 0], sizes = [8, 8], strides = [1, 1]} : vector<8x32xf32> to vector<8x8xf32>
    %51 = vector.extract_strided_slice %46 {offsets = [0, 0], sizes = [8, 8], strides = [1, 1]} : vector<8x32xf32> to vector<8x8xf32>
    %cst_37 = arith.constant dense<0.000000e+00> : vector<8x8xf32>
    %52 = tpu.matmul %49, %50, %cst_37 {dimension_numbers = #tpu.dot_dimension_numbers<[1], [1], [0], [0], [0, 0, 1, 0], [], []>} : vector<8x8xf32>, vector<8x8xf32>, vector<8x8xf32> -> vector<8x8xf32>
    %cst_38 = arith.constant 0.353553385 : f32
    %53 = vector.broadcast %cst_38 : f32 to vector<8x8xf32>
    %54 = arith.mulf %52, %53 : vector<8x8xf32>
    %cst_39 = arith.constant dense<0xFF800000> : vector<8xf32>
    %55 = vector.multi_reduction <maximumf>, %54, %cst_39 [1] : vector<8x8xf32> to vector<8xf32>
    %56 = vector.shape_cast %55 : vector<8xf32> to vector<8x1xf32>
    %57 = vector.broadcast %56 : vector<8x1xf32> to vector<8x8xf32>
    %58 = arith.subf %54, %57 : vector<8x8xf32>
    %59 = math.exp %58 : vector<8x8xf32>
    %cst_40 = arith.constant dense<0.000000e+00> : vector<8xf32>
    %60 = vector.multi_reduction <add>, %59, %cst_40 [1] : vector<8x8xf32> to vector<8xf32>
    %61 = vector.shape_cast %60 : vector<8xf32> to vector<8x1xf32>
    %62 = vector.broadcast %61 : vector<8x1xf32> to vector<8x8xf32>
    %63 = arith.divf %59, %62 : vector<8x8xf32>
    %cst_41 = arith.constant dense<0.000000e+00> : vector<8x8xf32>
    %64 = tpu.matmul %63, %51, %cst_41 {dimension_numbers = #tpu.dot_dimension_numbers<[1], [0], [0], [1], [0, 0, 1, 1], [], []>} : vector<8x8xf32>, vector<8x8xf32>, vector<8x8xf32> -> vector<8x8xf32>
    %65 = vector.extract_strided_slice %47 {offsets = [0, 0], sizes = [8, 32], strides = [1, 1]} : vector<32x32xf32> to vector<8x32xf32>
    %cst_42 = arith.constant dense<0.000000e+00> : vector<8x32xf32>
    %66 = tpu.matmul %64, %65, %cst_42 {dimension_numbers = #tpu.dot_dimension_numbers<[1], [0], [0], [1], [0, 0, 1, 1], [], []>} : vector<8x8xf32>, vector<8x32xf32>, vector<8x32xf32> -> vector<8x32xf32>
    %67 = arith.addf %48, %66 : vector<8x32xf32>
    %68 = vector.extract_strided_slice %36 {offsets = [0, 8], sizes = [8, 8], strides = [1, 1]} : vector<8x32xf32> to vector<8x8xf32>
    %69 = vector.extract_strided_slice %41 {offsets = [0, 8], sizes = [8, 8], strides = [1, 1]} : vector<8x32xf32> to vector<8x8xf32>
    %70 = vector.extract_strided_slice %46 {offsets = [0, 8], sizes = [8, 8], strides = [1, 1]} : vector<8x32xf32> to vector<8x8xf32>
    %cst_43 = arith.constant dense<0.000000e+00> : vector<8x8xf32>
    %71 = tpu.matmul %68, %69, %cst_43 {dimension_numbers = #tpu.dot_dimension_numbers<[1], [1], [0], [0], [0, 0, 1, 0], [], []>} : vector<8x8xf32>, vector<8x8xf32>, vector<8x8xf32> -> vector<8x8xf32>
    %cst_44 = arith.constant 0.353553385 : f32
    %72 = vector.broadcast %cst_44 : f32 to vector<8x8xf32>
    %73 = arith.mulf %71, %72 : vector<8x8xf32>
    %cst_45 = arith.constant dense<0xFF800000> : vector<8xf32>
    %74 = vector.multi_reduction <maximumf>, %73, %cst_45 [1] : vector<8x8xf32> to vector<8xf32>
    %75 = vector.shape_cast %74 : vector<8xf32> to vector<8x1xf32>
    %76 = vector.broadcast %75 : vector<8x1xf32> to vector<8x8xf32>
    %77 = arith.subf %73, %76 : vector<8x8xf32>
    %78 = math.exp %77 : vector<8x8xf32>
    %cst_46 = arith.constant dense<0.000000e+00> : vector<8xf32>
    %79 = vector.multi_reduction <add>, %78, %cst_46 [1] : vector<8x8xf32> to vector<8xf32>
    %80 = vector.shape_cast %79 : vector<8xf32> to vector<8x1xf32>
    %81 = vector.broadcast %80 : vector<8x1xf32> to vector<8x8xf32>
    %82 = arith.divf %78, %81 : vector<8x8xf32>
    %cst_47 = arith.constant dense<0.000000e+00> : vector<8x8xf32>
    %83 = tpu.matmul %82, %70, %cst_47 {dimension_numbers = #tpu.dot_dimension_numbers<[1], [0], [0], [1], [0, 0, 1, 1], [], []>} : vector<8x8xf32>, vector<8x8xf32>, vector<8x8xf32> -> vector<8x8xf32>
    %84 = vector.extract_strided_slice %47 {offsets = [8, 0], sizes = [8, 32], strides = [1, 1]} : vector<32x32xf32> to vector<8x32xf32>
    %cst_48 = arith.constant dense<0.000000e+00> : vector<8x32xf32>
    %85 = tpu.matmul %83, %84, %cst_48 {dimension_numbers = #tpu.dot_dimension_numbers<[1], [0], [0], [1], [0, 0, 1, 1], [], []>} : vector<8x8xf32>, vector<8x32xf32>, vector<8x32xf32> -> vector<8x32xf32>
    %86 = arith.addf %67, %85 : vector<8x32xf32>
    %87 = vector.extract_strided_slice %36 {offsets = [0, 16], sizes = [8, 8], strides = [1, 1]} : vector<8x32xf32> to vector<8x8xf32>
    %88 = vector.extract_strided_slice %41 {offsets = [0, 16], sizes = [8, 8], strides = [1, 1]} : vector<8x32xf32> to vector<8x8xf32>
    %89 = vector.extract_strided_slice %46 {offsets = [0, 16], sizes = [8, 8], strides = [1, 1]} : vector<8x32xf32> to vector<8x8xf32>
    %cst_49 = arith.constant dense<0.000000e+00> : vector<8x8xf32>
    %90 = tpu.matmul %87, %88, %cst_49 {dimension_numbers = #tpu.dot_dimension_numbers<[1], [1], [0], [0], [0, 0, 1, 0], [], []>} : vector<8x8xf32>, vector<8x8xf32>, vector<8x8xf32> -> vector<8x8xf32>
    %cst_50 = arith.constant 0.353553385 : f32
    %91 = vector.broadcast %cst_50 : f32 to vector<8x8xf32>
    %92 = arith.mulf %90, %91 : vector<8x8xf32>
    %cst_51 = arith.constant dense<0xFF800000> : vector<8xf32>
    %93 = vector.multi_reduction <maximumf>, %92, %cst_51 [1] : vector<8x8xf32> to vector<8xf32>
    %94 = vector.shape_cast %93 : vector<8xf32> to vector<8x1xf32>
    %95 = vector.broadcast %94 : vector<8x1xf32> to vector<8x8xf32>
    %96 = arith.subf %92, %95 : vector<8x8xf32>
    %97 = math.exp %96 : vector<8x8xf32>
    %cst_52 = arith.constant dense<0.000000e+00> : vector<8xf32>
    %98 = vector.multi_reduction <add>, %97, %cst_52 [1] : vector<8x8xf32> to vector<8xf32>
    %99 = vector.shape_cast %98 : vector<8xf32> to vector<8x1xf32>
    %100 = vector.broadcast %99 : vector<8x1xf32> to vector<8x8xf32>
    %101 = arith.divf %97, %100 : vector<8x8xf32>
    %cst_53 = arith.constant dense<0.000000e+00> : vector<8x8xf32>
    %102 = tpu.matmul %101, %89, %cst_53 {dimension_numbers = #tpu.dot_dimension_numbers<[1], [0], [0], [1], [0, 0, 1, 1], [], []>} : vector<8x8xf32>, vector<8x8xf32>, vector<8x8xf32> -> vector<8x8xf32>
    %103 = vector.extract_strided_slice %47 {offsets = [16, 0], sizes = [8, 32], strides = [1, 1]} : vector<32x32xf32> to vector<8x32xf32>
    %cst_54 = arith.constant dense<0.000000e+00> : vector<8x32xf32>
    %104 = tpu.matmul %102, %103, %cst_54 {dimension_numbers = #tpu.dot_dimension_numbers<[1], [0], [0], [1], [0, 0, 1, 1], [], []>} : vector<8x8xf32>, vector<8x32xf32>, vector<8x32xf32> -> vector<8x32xf32>
    %105 = arith.addf %86, %104 : vector<8x32xf32>
    %106 = vector.extract_strided_slice %36 {offsets = [0, 24], sizes = [8, 8], strides = [1, 1]} : vector<8x32xf32> to vector<8x8xf32>
    %107 = vector.extract_strided_slice %41 {offsets = [0, 24], sizes = [8, 8], strides = [1, 1]} : vector<8x32xf32> to vector<8x8xf32>
    %108 = vector.extract_strided_slice %46 {offsets = [0, 24], sizes = [8, 8], strides = [1, 1]} : vector<8x32xf32> to vector<8x8xf32>
    %cst_55 = arith.constant dense<0.000000e+00> : vector<8x8xf32>
    %109 = tpu.matmul %106, %107, %cst_55 {dimension_numbers = #tpu.dot_dimension_numbers<[1], [1], [0], [0], [0, 0, 1, 0], [], []>} : vector<8x8xf32>, vector<8x8xf32>, vector<8x8xf32> -> vector<8x8xf32>
    %cst_56 = arith.constant 0.353553385 : f32
    %110 = vector.broadcast %cst_56 : f32 to vector<8x8xf32>
    %111 = arith.mulf %109, %110 : vector<8x8xf32>
    %cst_57 = arith.constant dense<0xFF800000> : vector<8xf32>
    %112 = vector.multi_reduction <maximumf>, %111, %cst_57 [1] : vector<8x8xf32> to vector<8xf32>
    %113 = vector.shape_cast %112 : vector<8xf32> to vector<8x1xf32>
    %114 = vector.broadcast %113 : vector<8x1xf32> to vector<8x8xf32>
    %115 = arith.subf %111, %114 : vector<8x8xf32>
    %116 = math.exp %115 : vector<8x8xf32>
    %cst_58 = arith.constant dense<0.000000e+00> : vector<8xf32>
    %117 = vector.multi_reduction <add>, %116, %cst_58 [1] : vector<8x8xf32> to vector<8xf32>
    %118 = vector.shape_cast %117 : vector<8xf32> to vector<8x1xf32>
    %119 = vector.broadcast %118 : vector<8x1xf32> to vector<8x8xf32>
    %120 = arith.divf %116, %119 : vector<8x8xf32>
    %cst_59 = arith.constant dense<0.000000e+00> : vector<8x8xf32>
    %121 = tpu.matmul %120, %108, %cst_59 {dimension_numbers = #tpu.dot_dimension_numbers<[1], [0], [0], [1], [0, 0, 1, 1], [], []>} : vector<8x8xf32>, vector<8x8xf32>, vector<8x8xf32> -> vector<8x8xf32>
    %122 = vector.extract_strided_slice %47 {offsets = [24, 0], sizes = [8, 32], strides = [1, 1]} : vector<32x32xf32> to vector<8x32xf32>
    %cst_60 = arith.constant dense<0.000000e+00> : vector<8x32xf32>
    %123 = tpu.matmul %121, %122, %cst_60 {dimension_numbers = #tpu.dot_dimension_numbers<[1], [0], [0], [1], [0, 0, 1, 1], [], []>} : vector<8x8xf32>, vector<8x32xf32>, vector<8x32xf32> -> vector<8x32xf32>
    %124 = arith.addf %105, %123 : vector<8x32xf32>
    %c0_61 = arith.constant 0 : index
    %c0_62 = arith.constant 0 : index
    %125 = vector.load %arg14[%c0_61, %c0_62] : memref<1x32xf32, #tpu.memory_space<vmem>>, vector<1x32xf32>
    %126 = vector.broadcast %125 : vector<1x32xf32> to vector<8x32xf32>
    %127 = arith.addf %124, %126 : vector<8x32xf32>
    %128 = arith.addf %127, %1 : vector<8x32xf32>
    %c0_63 = arith.constant 0 : index
    %c0_64 = arith.constant 0 : index
    %129 = vector.load %arg15[%c0_63, %c0_64] : memref<1x32xf32, #tpu.memory_space<vmem>>, vector<1x32xf32>
    %c0_65 = arith.constant 0 : index
    %c0_66 = arith.constant 0 : index
    %130 = vector.load %arg16[%c0_65, %c0_66] : memref<1x32xf32, #tpu.memory_space<vmem>>, vector<1x32xf32>
    %cst_67 = arith.constant dense<0.000000e+00> : vector<8xf32>
    %131 = vector.multi_reduction <add>, %128, %cst_67 [1] : vector<8x32xf32> to vector<8xf32>
    %132 = vector.shape_cast %131 : vector<8xf32> to vector<8x1xf32>
    %cst_68 = arith.constant 3.200000e+01 : f32
    %133 = vector.broadcast %cst_68 : f32 to vector<8x1xf32>
    %134 = arith.divf %132, %133 : vector<8x1xf32>
    %135 = vector.broadcast %134 : vector<8x1xf32> to vector<8x32xf32>
    %136 = arith.subf %128, %135 : vector<8x32xf32>
    %137 = arith.mulf %136, %136 : vector<8x32xf32>
    %cst_69 = arith.constant dense<0.000000e+00> : vector<8xf32>
    %138 = vector.multi_reduction <add>, %137, %cst_69 [1] : vector<8x32xf32> to vector<8xf32>
    %139 = vector.shape_cast %138 : vector<8xf32> to vector<8x1xf32>
    %cst_70 = arith.constant 3.200000e+01 : f32
    %140 = vector.broadcast %cst_70 : f32 to vector<8x1xf32>
    %141 = arith.divf %139, %140 : vector<8x1xf32>
    %142 = vector.broadcast %134 : vector<8x1xf32> to vector<8x32xf32>
    %143 = arith.subf %128, %142 : vector<8x32xf32>
    %cst_71 = arith.constant 9.99999974E-6 : f32
    %144 = vector.broadcast %cst_71 : f32 to vector<8x1xf32>
    %145 = arith.addf %141, %144 : vector<8x1xf32>
    %146 = math.rsqrt %145 : vector<8x1xf32>
    %147 = vector.broadcast %146 : vector<8x1xf32> to vector<8x32xf32>
    %148 = arith.mulf %143, %147 : vector<8x32xf32>
    %149 = vector.broadcast %129 : vector<1x32xf32> to vector<8x32xf32>
    %150 = arith.mulf %148, %149 : vector<8x32xf32>
    %151 = vector.broadcast %130 : vector<1x32xf32> to vector<8x32xf32>
    %152 = arith.addf %150, %151 : vector<8x32xf32>
    %c0_72 = arith.constant 0 : index
    %c0_73 = arith.constant 0 : index
    %153 = vector.load %arg17[%c0_72, %c0_73] : memref<32x128xf32, #tpu.memory_space<vmem>>, vector<32x128xf32>
    %cst_74 = arith.constant dense<0.000000e+00> : vector<8x128xf32>
    %154 = tpu.matmul %152, %153, %cst_74 {dimension_numbers = #tpu.dot_dimension_numbers<[1], [0], [0], [1], [0, 0, 1, 1], [], []>} : vector<8x32xf32>, vector<32x128xf32>, vector<8x128xf32> -> vector<8x128xf32>
    %cst_75 = arith.constant 0.000000e+00 : f32
    %155 = vector.broadcast %cst_75 : f32 to vector<8x128xf32>
    %156 = arith.maximumf %154, %155 : vector<8x128xf32>
    %c0_76 = arith.constant 0 : index
    %c0_77 = arith.constant 0 : index
    %157 = vector.load %arg18[%c0_76, %c0_77] : memref<128x32xf32, #tpu.memory_space<vmem>>, vector<128x32xf32>
    %cst_78 = arith.constant dense<0.000000e+00> : vector<8x32xf32>
    %158 = tpu.matmul %156, %157, %cst_78 {dimension_numbers = #tpu.dot_dimension_numbers<[1], [0], [0], [1], [0, 0, 1, 1], [], []>} : vector<8x128xf32>, vector<128x32xf32>, vector<8x32xf32> -> vector<8x32xf32>
    %159 = arith.addf %128, %158 : vector<8x32xf32>
    %c0_79 = arith.constant 0 : index
    %c0_80 = arith.constant 0 : index
    %c0_81 = arith.constant 0 : index
    %160 = vector.load %arg19[%c0_79, %c0_80, %c0_81] : memref<1x8x32xf32, #tpu.memory_space<vmem>>, vector<1x8x32xf32>
    %161 = vector.shape_cast %160 : vector<1x8x32xf32> to vector<8x32xf32>
    %162 = vector.shape_cast %159 : vector<8x32xf32> to vector<1x8x32xf32>
    tpu.vector_store %arg19[%c0_79, %c0_80, %c0_81], %162 {strides = array<i32>} : memref<1x8x32xf32, #tpu.memory_space<vmem>>, vector<1x8x32xf32>,
    return
  }
  func.func @transform_0(%arg0: i32) -> (i32, i32, i32) {
    %c0_i32 = arith.constant 0 : i32
    %c0_i32_0 = arith.constant 0 : i32
    %c0_i32_1 = arith.constant 0 : i32
    return %arg0, %c0_i32, %c0_i32_0 : i32, i32, i32
  }
  func.func @transform_1(%arg0: i32) -> (i32, i32) {
    %c0_i32 = arith.constant 0 : i32
    %c0_i32_0 = arith.constant 0 : i32
    %c0_i32_1 = arith.constant 0 : i32
    return %c0_i32, %c0_i32_0 : i32, i32
  }
  func.func @transform_2(%arg0: i32) -> (i32, i32) {
    %c0_i32 = arith.constant 0 : i32
    %c0_i32_0 = arith.constant 0 : i32
    %c0_i32_1 = arith.constant 0 : i32
    return %c0_i32, %c0_i32_0 : i32, i32
  }
  func.func @transform_3(%arg0: i32) -> (i32, i32) {
    %c0_i32 = arith.constant 0 : i32
    %c0_i32_0 = arith.constant 0 : i32
    %c0_i32_1 = arith.constant 0 : i32
    return %c0_i32, %c0_i32_0 : i32, i32
  }
  func.func @transform_4(%arg0: i32) -> (i32, i32) {
    %c0_i32 = arith.constant 0 : i32
    %c0_i32_0 = arith.constant 0 : i32
    %c0_i32_1 = arith.constant 0 : i32
    return %c0_i32, %c0_i32_0 : i32, i32
  }
  func.func @transform_5(%arg0: i32) -> (i32, i32) {
    %c0_i32 = arith.constant 0 : i32
    %c0_i32_0 = arith.constant 0 : i32
    %c0_i32_1 = arith.constant 0 : i32
    return %c0_i32, %c0_i32_0 : i32, i32
  }
  func.func @transform_6(%arg0: i32) -> (i32, i32) {
    %c0_i32 = arith.constant 0 : i32
    %c0_i32_0 = arith.constant 0 : i32
    %c0_i32_1 = arith.constant 0 : i32
    return %c0_i32, %c0_i32_0 : i32, i32
  }
  func.func @transform_7(%arg0: i32) -> (i32, i32) {
    %c0_i32 = arith.constant 0 : i32
    %c0_i32_0 = arith.constant 0 : i32
    %c0_i32_1 = arith.constant 0 : i32
    return %c0_i32, %c0_i32_0 : i32, i32
  }
  func.func @transform_8(%arg0: i32) -> (i32, i32) {
    %c0_i32 = arith.constant 0 : i32
    %c0_i32_0 = arith.constant 0 : i32
    %c0_i32_1 = arith.constant 0 : i32
    return %c0_i32, %c0_i32_0 : i32, i32
  }
  func.func @transform_9(%arg0: i32) -> (i32, i32) {
    %c0_i32 = arith.constant 0 : i32
    %c0_i32_0 = arith.constant 0 : i32
    %c0_i32_1 = arith.constant 0 : i32
    return %c0_i32, %c0_i32_0 : i32, i32
  }
  func.func @transform_10(%arg0: i32) -> (i32, i32) {
    %c0_i32 = arith.constant 0 : i32
    %c0_i32_0 = arith.constant 0 : i32
    %c0_i32_1 = arith.constant 0 : i32
    return %c0_i32, %c0_i32_0 : i32, i32
  }
  func.func @transform_11(%arg0: i32) -> (i32, i32) {
    %c0_i32 = arith.constant 0 : i32
    %c0_i32_0 = arith.constant 0 : i32
    %c0_i32_1 = arith.constant 0 : i32
    return %c0_i32, %c0_i32_0 : i32, i32
  }
  func.func @transform_12(%arg0: i32) -> (i32, i32) {
    %c0_i32 = arith.constant 0 : i32
    %c0_i32_0 = arith.constant 0 : i32
    %c0_i32_1 = arith.constant 0 : i32
    return %c0_i32, %c0_i32_0 : i32, i32
  }
  func.func @transform_13(%arg0: i32) -> (i32, i32) {
    %c0_i32 = arith.constant 0 : i32
    %c0_i32_0 = arith.constant 0 : i32
    %c0_i32_1 = arith.constant 0 : i32
    return %c0_i32, %c0_i32_0 : i32, i32
  }
  func.func @transform_14(%arg0: i32) -> (i32, i32) {
    %c0_i32 = arith.constant 0 : i32
    %c0_i32_0 = arith.constant 0 : i32
    %c0_i32_1 = arith.constant 0 : i32
    return %c0_i32, %c0_i32_0 : i32, i32
  }
  func.func @transform_15(%arg0: i32) -> (i32, i32) {
    %c0_i32 = arith.constant 0 : i32
    %c0_i32_0 = arith.constant 0 : i32
    %c0_i32_1 = arith.constant 0 : i32
    return %c0_i32, %c0_i32_0 : i32, i32
  }
  func.func @transform_16(%arg0: i32) -> (i32, i32) {
    %c0_i32 = arith.constant 0 : i32
    %c0_i32_0 = arith.constant 0 : i32
    %c0_i32_1 = arith.constant 0 : i32
    return %c0_i32, %c0_i32_0 : i32, i32
  }
  func.func @transform_17(%arg0: i32) -> (i32, i32) {
    %c0_i32 = arith.constant 0 : i32
    %c0_i32_0 = arith.constant 0 : i32
    %c0_i32_1 = arith.constant 0 : i32
    return %c0_i32, %c0_i32_0 : i32, i32
  }
  func.func @transform_18(%arg0: i32) -> (i32, i32, i32) {
    %c0_i32 = arith.constant 0 : i32
    %c0_i32_0 = arith.constant 0 : i32
    %c0_i32_1 = arith.constant 0 : i32
    return %arg0, %c0_i32, %c0_i32_0 : i32, i32, i32
  }
}

</mosaic_0001>

<llo_original>
// kernel: tpu_custom_call.1
$region0: #{tpu_custom_call.1}
  #allocation0 [shape = 'u32[]', space=smem, size = 0x4, offset = 0x4, fixed_abs, tag = 'smem constant byte address 0x4 - core index']
  #allocation1 [shape = 'u32[144,128]{1,0:T(1,128)}', space=vmem, size = 0x12000, scoped, tag = 'internal scratch']
  %s0 = inlined_call_operand.hbm [shape: f32[2,8,32], index: 0, kind: input, shape index: {}]
  %s1 = inlined_call_operand.hbm [shape: f32[1,32], index: 1, kind: input, shape index: {}]
  %s2 = inlined_call_operand.hbm [shape: f32[1,32], index: 2, kind: input, shape index: {}]
  %s3 = inlined_call_operand.vmem [shape: f32[32,32], index: 3, kind: input, shape index: {}]
  %s4 = inlined_call_operand.vmem [shape: f32[32,32], index: 4, kind: input, shape index: {}]
  %s5 = inlined_call_operand.vmem [shape: f32[32,32], index: 5, kind: input, shape index: {}]
  %s6 = inlined_call_operand.vmem [shape: f32[32,32], index: 6, kind: input, shape index: {}]
  %s7 = inlined_call_operand.vmem [shape: f32[32,32], index: 7, kind: input, shape index: {}]
  %s8 = inlined_call_operand.hbm [shape: f32[32,32], index: 8, kind: input, shape index: {}]
  %s9 = inlined_call_operand.hbm [shape: f32[1,32], index: 9, kind: input, shape index: {}]
  %s10 = inlined_call_operand.hbm [shape: f32[1,32], index: 10, kind: input, shape index: {}]
  %s11 = inlined_call_operand.hbm [shape: f32[1,32], index: 11, kind: input, shape index: {}]
  %s12 = inlined_call_operand.vmem [shape: f32[32,32], index: 12, kind: input, shape index: {}]
  %s13 = inlined_call_operand.hbm [shape: f32[1,32], index: 13, kind: input, shape index: {}]
  %s14 = inlined_call_operand.hbm [shape: f32[1,32], index: 14, kind: input, shape index: {}]
  %s15 = inlined_call_operand.hbm [shape: f32[1,32], index: 15, kind: input, shape index: {}]
  %s16 = inlined_call_operand.hbm [shape: f32[32,128], index: 16, kind: input, shape index: {}]
  %s17 = inlined_call_operand.vmem [shape: f32[128,32], index: 17, kind: input, shape index: {}]
  %s18 = inlined_call_operand.hbm [shape: f32[2,8,32], index: 18, kind: output, shape index: {}]
  %s19 = sld [smem:[#allocation0]]
  $region149: #{tpu_custom_call.1} parent=0
    _
  %s21 = ssub.s32 1, %s19
  %s22 = scalar_select 0, %s21, %s19
  $region1: #{tpu_custom_call.1} parent=0
    #allocation2 [shape = 'u8[8192]{0}', space=vmem, size = 0x2000, scoped, tag = 'input window, operand 0']
    #allocation3 [shape = 's32[2]{0}', space=sflag, size = 0x8, scoped, tag = 'scoped memory for tpu_custom_call.1']
    #allocation4 [shape = 's32[2]{0}', space=sflag, size = 0x8, scoped, tag = 'scoped memory for tpu_custom_call.1']
    #allocation5 [shape = 'u8[512]{0}', space=vmem, size = 0x400, scoped, tag = 'input window, operand 1, single buffered']
    #allocation6 [shape = 's32[1]{0}', space=sflag, size = 0x4, scoped, tag = 'scoped memory for tpu_custom_call.1']
    #allocation7 [shape = 'u8[512]{0}', space=vmem, size = 0x400, scoped, tag = 'input window, operand 2, single buffered']
    #allocation8 [shape = 'u8[16384]{0}', space=vmem, size = 0x4000, scoped, tag = 'input window, operand 8, single buffered']
    #allocation9 [shape = 's32[1]{0}', space=sflag, size = 0x4, scoped, tag = 'scoped memory for tpu_custom_call.1']
    #allocation10 [shape = 'u8[512]{0}', space=vmem, size = 0x400, scoped, tag = 'input window, operand 9, single buffered']
    #allocation11 [shape = 'u8[512]{0}', space=vmem, size = 0x400, scoped, tag = 'input window, operand 10, single buffered']
    #allocation12 [shape = 's32[1]{0}', space=sflag, size = 0x4, scoped, tag = 'scoped memory for tpu_custom_call.1']
    #allocation13 [shape = 'u8[512]{0}', space=vmem, size = 0x400, scoped, tag = 'input window, operand 11, single buffered']
    #allocation14 [shape = 'u8[512]{0}', space=vmem, size = 0x400, scoped, tag = 'input window, operand 13, single buffered']
    #allocation15 [shape = 's32[1]{0}', space=sflag, size = 0x4, scoped, tag = 'scoped memory for tpu_custom_call.1']
    #allocation16 [shape = 'u8[512]{0}', space=vmem, size = 0x400, scoped, tag = 'input window, operand 14, single buffered']
    #allocation17 [shape = 'u8[512]{0}', space=vmem, size = 0x400, scoped, tag = 'input window, operand 15, single buffered']
    #allocation18 [shape = 's32[1]{0}', space=sflag, size = 0x4, scoped, tag = 'scoped memory for tpu_custom_call.1']
    #allocation19 [shape = 'u8[16384]{0}', space=vmem, size = 0x4000, scoped, tag = 'input window, operand 16, single buffered']
    #allocation20 [shape = 'u8[8192]{0}', space=vmem, size = 0x2000, scoped, tag = 'output window, operand 0']
    %23 = vsyncpa [#allocation3], 0
    %s24 = scalar_lea.sflag [#allocation3], 1
    %25 = vsyncpa %s24, 0
    %26 = vsyncpa [#allocation6], 0
    %27 = vsyncpa [#allocation9], 0
    %28 = vsyncpa [#allocation12], 0
    %29 = vsyncpa [#allocation15], 0
    %30 = vsyncpa [#allocation18], 0
    %31 = vsyncpa [#allocation4], 0
    %s32 = scalar_lea.sflag [#allocation4], 1
    %33 = vsyncpa %s32, 0
    loop: start=0, step=1, limit=4
    $region2: #{tpu_custom_call.1} parent=1 // loop_pre_header
      _
    $region3: #{tpu_custom_call.1} parent=1 // loop_header
      %s35 = sphi 0, %s39
      %p36 = scmp.ge.s32.totalorder %s35, 4
      %s45 = sphi 0, %s47
      %s48 = sphi 0, %s45
      %s49 = sphi 0, %s48
      %s65 = sphi 0, %s49
      %s69 = sphi 0, %s69
      %s71 = sphi 0, %s69
      %s72 = sphi 0, %s71
      %s86 = sphi 0, %s72
      %s90 = sphi 0, %s90
      %s92 = sphi 0, %s90
      %s93 = sphi 0, %s92
      %s107 = sphi 0, %s93
      %s111 = sphi 0, %s111
      %s113 = sphi 0, %s111
      %s114 = sphi 0, %s113
      %s128 = sphi 0, %s114
      %s132 = sphi 0, %s132
      %s134 = sphi 0, %s132
      %s135 = sphi 0, %s134
      %s149 = sphi 0, %s135
      %s153 = sphi 0, %s153
      %s155 = sphi 0, %s153
      %s156 = sphi 0, %s155
      %s170 = sphi 0, %s156
      %s174 = sphi 0, %s174
      %s176 = sphi 0, %s174
      %s177 = sphi 0, %s176
      %s191 = sphi 0, %s177
      %s195 = sphi 0, %s195
      %s197 = sphi 0, %s195
      %s198 = sphi 0, %s197
      %s212 = sphi 0, %s198
      %s216 = sphi 0, %s216
      %s218 = sphi 0, %s216
      %s219 = sphi 0, %s218
      %s233 = sphi 0, %s219
      %s237 = sphi 0, %s237
      %s239 = sphi 0, %s237
      %s240 = sphi 0, %s239
      %s254 = sphi 0, %s240
      %s258 = sphi 0, %s258
      %s260 = sphi 0, %s258
      %s261 = sphi 0, %s260
      %s275 = sphi 0, %s261
      %s279 = sphi 0, %s279
      %s281 = sphi 0, %s279
      %s282 = sphi 0, %s281
      %s296 = sphi 0, %s282
      %s300 = sphi 0, %s300
      %s302 = sphi 0, %s300
      %s303 = sphi 0, %s302
      %s317 = sphi 0, %s303
      %s321 = sphi 0, %s321
      %s323 = sphi 0, %s321
      %s324 = sphi 0, %s323
      %s338 = sphi 0, %s324
      %s342 = sphi 0, %s342
      %s344 = sphi 0, %s342
      %s345 = sphi 0, %s344
      %s359 = sphi 0, %s345
      %s363 = sphi 0, %s363
      %s365 = sphi 0, %s363
      %s366 = sphi 0, %s365
      %s380 = sphi 0, %s366
      %s384 = sphi 0, %s384
      %s386 = sphi 0, %s384
      %s387 = sphi 0, %s386
      %s401 = sphi 0, %s387
      %s405 = sphi 0, %s405
      %s407 = sphi 0, %s405
      %s408 = sphi 0, %s407
      %s422 = sphi 0, %s408
      %s428 = sphi 0, %s430
      %s431 = sphi 0, %s428
      %s432 = sphi 0, %s431
      %s448 = sphi 0, %s432
    $region4: #{tpu_custom_call.1} parent=1 // loop_header_branch
      %38 = sbr.rel (%p36) target = $region8
    $region5: #{tpu_custom_call.1} parent=1 // loop_body
      %s40 = ssub.s32 %s35, 1
      %s41 = ssub.s32 %s35, 2
      %s42 = sadd.s32 %s35, 1
      %s43 = ssub.s32 %s35, %s42
      %p44 = scmp.eq.s32.totalorder %s43, 0
      %s46 = sadd.s32 %s45, 1
      %s47 = scalar_select %p44, %s45, %s46
      %p50 = pneg %p44
      %p51 = scmp.eq.s32.totalorder %s35, 1
      %p52 = por %p50, %p51
      %p53 = scmp.ne.s32.totalorder %s45, %s48
      %p54 = scmp.eq.s32.totalorder %s35, 0
      %p55 = por %p53, %p54
      %p56 = scmp.ne.s32.totalorder %s45, %s48
      %p57 = scmp.eq.s32.totalorder %s40, 1
      %p58 = por %p56, %p57
      %p59 = scmp.ne.s32.totalorder %s48, %s49
      %p60 = scmp.eq.s32.totalorder %s40, 0
      %p61 = por %p59, %p60
      %p62 = scmp.ne.s32.totalorder %s48, %s49
      %p63 = scmp.eq.s32.totalorder %s41, 1
      %p64 = por %p62, %p63
      %p66 = scmp.ne.s32.totalorder %s49, %s65
      %p67 = scmp.eq.s32.totalorder %s41, 0
      %p68 = por %p66, %p67
      %s70 = sadd.s32 %s69, 1
      %p73 = scmp.eq.s32.totalorder %s35, 1
      %p74 = scmp.ne.s32.totalorder %s69, %s71
      %p75 = scmp.eq.s32.totalorder %s35, 0
      %p76 = por %p74, %p75
      %p77 = scmp.ne.s32.totalorder %s69, %s71
      %p78 = scmp.eq.s32.totalorder %s40, 1
      %p79 = por %p77, %p78
      %p80 = scmp.ne.s32.totalorder %s71, %s72
      %p81 = scmp.eq.s32.totalorder %s40, 0
      %p82 = por %p80, %p81
      %p83 = scmp.ne.s32.totalorder %s71, %s72
      %p84 = scmp.eq.s32.totalorder %s41, 1
      %p85 = por %p83, %p84
      %p87 = scmp.ne.s32.totalorder %s72, %s86
      %p88 = scmp.eq.s32.totalorder %s41, 0
      %p89 = por %p87, %p88
      %s91 = sadd.s32 %s90, 1
      %p94 = scmp.eq.s32.totalorder %s35, 1
      %p95 = scmp.ne.s32.totalorder %s90, %s92
      %p96 = scmp.eq.s32.totalorder %s35, 0
      %p97 = por %p95, %p96
      %p98 = scmp.ne.s32.totalorder %s90, %s92
      %p99 = scmp.eq.s32.totalorder %s40, 1
      %p100 = por %p98, %p99
      %p101 = scmp.ne.s32.totalorder %s92, %s93
      %p102 = scmp.eq.s32.totalorder %s40, 0
      %p103 = por %p101, %p102
      %p104 = scmp.ne.s32.totalorder %s92, %s93
      %p105 = scmp.eq.s32.totalorder %s41, 1
      %p106 = por %p104, %p105
      %p108 = scmp.ne.s32.totalorder %s93, %s107
      %p109 = scmp.eq.s32.totalorder %s41, 0
      %p110 = por %p108, %p109
      %s112 = sadd.s32 %s111, 1
      %p115 = scmp.eq.s32.totalorder %s35, 1
      %p116 = scmp.ne.s32.totalorder %s111, %s113
      %p117 = scmp.eq.s32.totalorder %s35, 0
      %p118 = por %p116, %p117
      %p119 = scmp.ne.s32.totalorder %s111, %s113
      %p120 = scmp.eq.s32.totalorder %s40, 1
      %p121 = por %p119, %p120
      %p122 = scmp.ne.s32.totalorder %s113, %s114
      %p123 = scmp.eq.s32.totalorder %s40, 0
      %p124 = por %p122, %p123
      %p125 = scmp.ne.s32.totalorder %s113, %s114
      %p126 = scmp.eq.s32.totalorder %s41, 1
      %p127 = por %p125, %p126
      %p129 = scmp.ne.s32.totalorder %s114, %s128
      %p130 = scmp.eq.s32.totalorder %s41, 0
      %p131 = por %p129, %p130
      %s133 = sadd.s32 %s132, 1
      %p136 = scmp.eq.s32.totalorder %s35, 1
      %p137 = scmp.ne.s32.totalorder %s132, %s134
      %p138 = scmp.eq.s32.totalorder %s35, 0
      %p139 = por %p137, %p138
      %p140 = scmp.ne.s32.totalorder %s132, %s134
      %p141 = scmp.eq.s32.totalorder %s40, 1
      %p142 = por %p140, %p141
      %p143 = scmp.ne.s32.totalorder %s134, %s135
      %p144 = scmp.eq.s32.totalorder %s40, 0
      %p145 = por %p143, %p144
      %p146 = scmp.ne.s32.totalorder %s134, %s135
      %p147 = scmp.eq.s32.totalorder %s41, 1
      %p148 = por %p146, %p147
      %p150 = scmp.ne.s32.totalorder %s135, %s149
      %p151 = scmp.eq.s32.totalorder %s41, 0
      %p152 = por %p150, %p151
      %s154 = sadd.s32 %s153, 1
      %p157 = scmp.eq.s32.totalorder %s35, 1
      %p158 = scmp.ne.s32.totalorder %s153, %s155
      %p159 = scmp.eq.s32.totalorder %s35, 0
      %p160 = por %p158, %p159
      %p161 = scmp.ne.s32.totalorder %s153, %s155
      %p162 = scmp.eq.s32.totalorder %s40, 1
      %p163 = por %p161, %p162
      %p164 = scmp.ne.s32.totalorder %s155, %s156
      %p165 = scmp.eq.s32.totalorder %s40, 0
      %p166 = por %p164, %p165
      %p167 = scmp.ne.s32.totalorder %s155, %s156
      %p168 = scmp.eq.s32.totalorder %s41, 1
      %p169 = por %p167, %p168
      %p171 = scmp.ne.s32.totalorder %s156, %s170
      %p172 = scmp.eq.s32.totalorder %s41, 0
      %p173 = por %p171, %p172
      %s175 = sadd.s32 %s174, 1
      %p178 = scmp.eq.s32.totalorder %s35, 1
      %p179 = scmp.ne.s32.totalorder %s174, %s176
      %p180 = scmp.eq.s32.totalorder %s35, 0
      %p181 = por %p179, %p180
      %p182 = scmp.ne.s32.totalorder %s174, %s176
      %p183 = scmp.eq.s32.totalorder %s40, 1
      %p184 = por %p182, %p183
      %p185 = scmp.ne.s32.totalorder %s176, %s177
      %p186 = scmp.eq.s32.totalorder %s40, 0
      %p187 = por %p185, %p186
      %p188 = scmp.ne.s32.totalorder %s176, %s177
      %p189 = scmp.eq.s32.totalorder %s41, 1
      %p190 = por %p188, %p189
      %p192 = scmp.ne.s32.totalorder %s177, %s191
      %p193 = scmp.eq.s32.totalorder %s41, 0
      %p194 = por %p192, %p193
      %s196 = sadd.s32 %s195, 1
      %p199 = scmp.eq.s32.totalorder %s35, 1
      %p200 = scmp.ne.s32.totalorder %s195, %s197
      %p201 = scmp.eq.s32.totalorder %s35, 0
      %p202 = por %p200, %p201
      %p203 = scmp.ne.s32.totalorder %s195, %s197
      %p204 = scmp.eq.s32.totalorder %s40, 1
      %p205 = por %p203, %p204
      %p206 = scmp.ne.s32.totalorder %s197, %s198
      %p207 = scmp.eq.s32.totalorder %s40, 0
      %p208 = por %p206, %p207
      %p209 = scmp.ne.s32.totalorder %s197, %s198
      %p210 = scmp.eq.s32.totalorder %s41, 1
      %p211 = por %p209, %p210
      %p213 = scmp.ne.s32.totalorder %s198, %s212
      %p214 = scmp.eq.s32.totalorder %s41, 0
      %p215 = por %p213, %p214
      %s217 = sadd.s32 %s216, 1
      %p220 = scmp.eq.s32.totalorder %s35, 1
      %p221 = scmp.ne.s32.totalorder %s216, %s218
      %p222 = scmp.eq.s32.totalorder %s35, 0
      %p223 = por %p221, %p222
      %p224 = scmp.ne.s32.totalorder %s216, %s218
      %p225 = scmp.eq.s32.totalorder %s40, 1
      %p226 = por %p224, %p225
      %p227 = scmp.ne.s32.totalorder %s218, %s219
      %p228 = scmp.eq.s32.totalorder %s40, 0
      %p229 = por %p227, %p228
      %p230 = scmp.ne.s32.totalorder %s218, %s219
      %p231 = scmp.eq.s32.totalorder %s41, 1
      %p232 = por %p230, %p231
      %p234 = scmp.ne.s32.totalorder %s219, %s233
      %p235 = scmp.eq.s32.totalorder %s41, 0
      %p236 = por %p234, %p235
      %s238 = sadd.s32 %s237, 1
      %p241 = scmp.eq.s32.totalorder %s35, 1
      %p242 = scmp.ne.s32.totalorder %s237, %s239
      %p243 = scmp.eq.s32.totalorder %s35, 0
      %p244 = por %p242, %p243
      %p245 = scmp.ne.s32.totalorder %s237, %s239
      %p246 = scmp.eq.s32.totalorder %s40, 1
      %p247 = por %p245, %p246
      %p248 = scmp.ne.s32.totalorder %s239, %s240
      %p249 = scmp.eq.s32.totalorder %s40, 0
      %p250 = por %p248, %p249
      %p251 = scmp.ne.s32.totalorder %s239, %s240
      %p252 = scmp.eq.s32.totalorder %s41, 1
      %p253 = por %p251, %p252
      %p255 = scmp.ne.s32.totalorder %s240, %s254
      %p256 = scmp.eq.s32.totalorder %s41, 0
      %p257 = por %p255, %p256
      %s259 = sadd.s32 %s258, 1
      %p262 = scmp.eq.s32.totalorder %s35, 1
      %p263 = scmp.ne.s32.totalorder %s258, %s260
      %p264 = scmp.eq.s32.totalorder %s35, 0
      %p265 = por %p263, %p264
      %p266 = scmp.ne.s32.totalorder %s258, %s260
      %p267 = scmp.eq.s32.totalorder %s40, 1
      %p268 = por %p266, %p267
      %p269 = scmp.ne.s32.totalorder %s260, %s261
      %p270 = scmp.eq.s32.totalorder %s40, 0
      %p271 = por %p269, %p270
      %p272 = scmp.ne.s32.totalorder %s260, %s261
      %p273 = scmp.eq.s32.totalorder %s41, 1
      %p274 = por %p272, %p273
      %p276 = scmp.ne.s32.totalorder %s261, %s275
      %p277 = scmp.eq.s32.totalorder %s41, 0
      %p278 = por %p276, %p277
      %s280 = sadd.s32 %s279, 1
      %p283 = scmp.eq.s32.totalorder %s35, 1
      %p284 = scmp.ne.s32.totalorder %s279, %s281
      %p285 = scmp.eq.s32.totalorder %s35, 0
      %p286 = por %p284, %p285
      %p287 = scmp.ne.s32.totalorder %s279, %s281
      %p288 = scmp.eq.s32.totalorder %s40, 1
      %p289 = por %p287, %p288
      %p290 = scmp.ne.s32.totalorder %s281, %s282
      %p291 = scmp.eq.s32.totalorder %s40, 0
      %p292 = por %p290, %p291
      %p293 = scmp.ne.s32.totalorder %s281, %s282
      %p294 = scmp.eq.s32.totalorder %s41, 1
      %p295 = por %p293, %p294
      %p297 = scmp.ne.s32.totalorder %s282, %s296
      %p298 = scmp.eq.s32.totalorder %s41, 0
      %p299 = por %p297, %p298
      %s301 = sadd.s32 %s300, 1
      %p304 = scmp.eq.s32.totalorder %s35, 1
      %p305 = scmp.ne.s32.totalorder %s300, %s302
      %p306 = scmp.eq.s32.totalorder %s35, 0
      %p307 = por %p305, %p306
      %p308 = scmp.ne.s32.totalorder %s300, %s302
      %p309 = scmp.eq.s32.totalorder %s40, 1
      %p310 = por %p308, %p309
      %p311 = scmp.ne.s32.totalorder %s302, %s303
      %p312 = scmp.eq.s32.totalorder %s40, 0
      %p313 = por %p311, %p312
      %p314 = scmp.ne.s32.totalorder %s302, %s303
      %p315 = scmp.eq.s32.totalorder %s41, 1
      %p316 = por %p314, %p315
      %p318 = scmp.ne.s32.totalorder %s303, %s317
      %p319 = scmp.eq.s32.totalorder %s41, 0
      %p320 = por %p318, %p319
      %s322 = sadd.s32 %s321, 1
      %p325 = scmp.eq.s32.totalorder %s35, 1
      %p326 = scmp.ne.s32.totalorder %s321, %s323
      %p327 = scmp.eq.s32.totalorder %s35, 0
      %p328 = por %p326, %p327
      %p329 = scmp.ne.s32.totalorder %s321, %s323
      %p330 = scmp.eq.s32.totalorder %s40, 1
      %p331 = por %p329, %p330
      %p332 = scmp.ne.s32.totalorder %s323, %s324
      %p333 = scmp.eq.s32.totalorder %s40, 0
      %p334 = por %p332, %p333
      %p335 = scmp.ne.s32.totalorder %s323, %s324
      %p336 = scmp.eq.s32.totalorder %s41, 1
      %p337 = por %p335, %p336
      %p339 = scmp.ne.s32.totalorder %s324, %s338
      %p340 = scmp.eq.s32.totalorder %s41, 0
      %p341 = por %p339, %p340
      %s343 = sadd.s32 %s342, 1
      %p346 = scmp.eq.s32.totalorder %s35, 1
      %p347 = scmp.ne.s32.totalorder %s342, %s344
      %p348 = scmp.eq.s32.totalorder %s35, 0
      %p349 = por %p347, %p348
      %p350 = scmp.ne.s32.totalorder %s342, %s344
      %p351 = scmp.eq.s32.totalorder %s40, 1
      %p352 = por %p350, %p351
      %p353 = scmp.ne.s32.totalorder %s344, %s345
      %p354 = scmp.eq.s32.totalorder %s40, 0
      %p355 = por %p353, %p354
      %p356 = scmp.ne.s32.totalorder %s344, %s345
      %p357 = scmp.eq.s32.totalorder %s41, 1
      %p358 = por %p356, %p357
      %p360 = scmp.ne.s32.totalorder %s345, %s359
      %p361 = scmp.eq.s32.totalorder %s41, 0
      %p362 = por %p360, %p361
      %s364 = sadd.s32 %s363, 1
      %p367 = scmp.eq.s32.totalorder %s35, 1
      %p368 = scmp.ne.s32.totalorder %s363, %s365
      %p369 = scmp.eq.s32.totalorder %s35, 0
      %p370 = por %p368, %p369
      %p371 = scmp.ne.s32.totalorder %s363, %s365
      %p372 = scmp.eq.s32.totalorder %s40, 1
      %p373 = por %p371, %p372
      %p374 = scmp.ne.s32.totalorder %s365, %s366
      %p375 = scmp.eq.s32.totalorder %s40, 0
      %p376 = por %p374, %p375
      %p377 = scmp.ne.s32.totalorder %s365, %s366
      %p378 = scmp.eq.s32.totalorder %s41, 1
      %p379 = por %p377, %p378
      %p381 = scmp.ne.s32.totalorder %s366, %s380
      %p382 = scmp.eq.s32.totalorder %s41, 0
      %p383 = por %p381, %p382
      %s385 = sadd.s32 %s384, 1
      %p388 = scmp.eq.s32.totalorder %s35, 1
      %p389 = scmp.ne.s32.totalorder %s384, %s386
      %p390 = scmp.eq.s32.totalorder %s35, 0
      %p391 = por %p389, %p390
      %p392 = scmp.ne.s32.totalorder %s384, %s386
      %p393 = scmp.eq.s32.totalorder %s40, 1
      %p394 = por %p392, %p393
      %p395 = scmp.ne.s32.totalorder %s386, %s387
      %p396 = scmp.eq.s32.totalorder %s40, 0
      %p397 = por %p395, %p396
      %p398 = scmp.ne.s32.totalorder %s386, %s387
      %p399 = scmp.eq.s32.totalorder %s41, 1
      %p400 = por %p398, %p399
      %p402 = scmp.ne.s32.totalorder %s387, %s401
      %p403 = scmp.eq.s32.totalorder %s41, 0
      %p404 = por %p402, %p403
      %s406 = sadd.s32 %s405, 1
      %p409 = scmp.eq.s32.totalorder %s35, 1
      %p410 = scmp.ne.s32.totalorder %s405, %s407
      %p411 = scmp.eq.s32.totalorder %s35, 0
      %p412 = por %p410, %p411
      %p413 = scmp.ne.s32.totalorder %s405, %s407
      %p414 = scmp.eq.s32.totalorder %s40, 1
      %p415 = por %p413, %p414
      %p416 = scmp.ne.s32.totalorder %s407, %s408
      %p417 = scmp.eq.s32.totalorder %s40, 0
      %p418 = por %p416, %p417
      %p419 = scmp.ne.s32.totalorder %s407, %s408
      %p420 = scmp.eq.s32.totalorder %s41, 1
      %p421 = por %p419, %p420
      %p423 = scmp.ne.s32.totalorder %s408, %s422
      %p424 = scmp.eq.s32.totalorder %s41, 0
      %p425 = por %p423, %p424
      %s426 = ssub.s32 %s35, %s42
      %p427 = scmp.eq.s32.totalorder %s426, 0
      %s429 = sadd.s32 %s428, 1
      %s430 = scalar_select %p427, %s428, %s429
      %p433 = pneg %p427
      %p434 = scmp.eq.s32.totalorder %s35, 1
      %p435 = por %p433, %p434
      %p436 = scmp.ne.s32.totalorder %s428, %s431
      %p437 = scmp.eq.s32.totalorder %s35, 0
      %p438 = por %p436, %p437
      %p439 = scmp.ne.s32.totalorder %s428, %s431
      %p440 = scmp.eq.s32.totalorder %s40, 1
      %p441 = por %p439, %p440
      %p442 = scmp.ne.s32.totalorder %s431, %s432
      %p443 = scmp.eq.s32.totalorder %s40, 0
      %p444 = por %p442, %p443
      %p445 = scmp.ne.s32.totalorder %s431, %s432
      %p446 = scmp.eq.s32.totalorder %s41, 1
      %p447 = por %p445, %p446
      %p449 = scmp.ne.s32.totalorder %s432, %s448
      %p450 = scmp.eq.s32.totalorder %s41, 0
      %p451 = por %p449, %p450
      %p452 = scmp.le.s32.totalorder 1, %s35
      %p453 = scmp.lt.s32.totalorder %s35, 3
      %p454 = pnand %p452, %p453
      %p455 = pneg %p454
      // Predicated region
      $region9: #{tpu_custom_call.1} parent=5 // pred_check
        _
      $region10: #{tpu_custom_call.1} parent=5 // pred_check_branch
        %457 = sbr.rel (%p454) target = $region12
      $region11: #{tpu_custom_call.1} parent=5 // pred_region
        %s458 = ssub.s32 %s35, 1
        // Predicated region
        $region13: #{tpu_custom_call.1} parent=11 // pred_check
          %p459 = pneg %p82
        $region14: #{tpu_custom_call.1} parent=11 // pred_check_branch
          %461 = sbr.rel (%p459) target = $region16
        $region15: #{tpu_custom_call.1} parent=11 // pred_region
          %s463 = ssub.s32 16, 16
          %464 = vsyncadd [#allocation6], %s463
          %s466 = sshll.u32 [#allocation5], 4
          %s467 = int_to_ptr.vmem [resolvable:$true] %s466
          %469 = dma.hbm_to_vmem [thread:$0]  %s1, 16, %s467, [#allocation6]
        $region16: #{tpu_custom_call.1} parent=11 // pred_fallthru
          _
        // Predicated region
        $region17: #{tpu_custom_call.1} parent=11 // pred_check
          %p470 = pneg %p103
        $region18: #{tpu_custom_call.1} parent=11 // pred_check_branch
          %472 = sbr.rel (%p470) target = $region20
        $region19: #{tpu_custom_call.1} parent=11 // pred_region
          %s474 = ssub.s32 16, 16
          %475 = vsyncadd [#allocation6], %s474
          %s477 = sshll.u32 [#allocation7], 4
          %s478 = int_to_ptr.vmem [resolvable:$true] %s477
          %480 = dma.hbm_to_vmem [thread:$0]  %s2, 16, %s478, [#allocation6]
        $region20: #{tpu_custom_call.1} parent=11 // pred_fallthru
          _
        // Predicated region
        $region21: #{tpu_custom_call.1} parent=11 // pred_check
          %p481 = pneg %p124
        $region22: #{tpu_custom_call.1} parent=11 // pred_check_branch
          %483 = sbr.rel (%p481) target = $region24
        $region23: #{tpu_custom_call.1} parent=11 // pred_region
          _
        $region24: #{tpu_custom_call.1} parent=11 // pred_fallthru
          _
        // Predicated region
        $region25: #{tpu_custom_call.1} parent=11 // pred_check
          %p484 = pneg %p145
        $region26: #{tpu_custom_call.1} parent=11 // pred_check_branch
          %486 = sbr.rel (%p484) target = $region28
        $region27: #{tpu_custom_call.1} parent=11 // pred_region
          _
        $region28: #{tpu_custom_call.1} parent=11 // pred_fallthru
          _
        // Predicated region
        $region29: #{tpu_custom_call.1} parent=11 // pred_check
          %p487 = pneg %p166
        $region30: #{tpu_custom_call.1} parent=11 // pred_check_branch
          %489 = sbr.rel (%p487) target = $region32
        $region31: #{tpu_custom_call.1} parent=11 // pred_region
          _
        $region32: #{tpu_custom_call.1} parent=11 // pred_fallthru
          _
        // Predicated region
        $region33: #{tpu_custom_call.1} parent=11 // pred_check
          %p490 = pneg %p187
        $region34: #{tpu_custom_call.1} parent=11 // pred_check_branch
          %492 = sbr.rel (%p490) target = $region36
        $region35: #{tpu_custom_call.1} parent=11 // pred_region
          _
        $region36: #{tpu_custom_call.1} parent=11 // pred_fallthru
          _
        // Predicated region
        $region37: #{tpu_custom_call.1} parent=11 // pred_check
          %p493 = pneg %p208
        $region38: #{tpu_custom_call.1} parent=11 // pred_check_branch
          %495 = sbr.rel (%p493) target = $region40
        $region39: #{tpu_custom_call.1} parent=11 // pred_region
          _
        $region40: #{tpu_custom_call.1} parent=11 // pred_fallthru
          _
        // Predicated region
        $region41: #{tpu_custom_call.1} parent=11 // pred_check
          %p496 = pneg %p229
        $region42: #{tpu_custom_call.1} parent=11 // pred_check_branch
          %498 = sbr.rel (%p496) target = $region44
        $region43: #{tpu_custom_call.1} parent=11 // pred_region
          %s500 = ssub.s32 512, 512
          %501 = vsyncadd [#allocation9], %s500
          %s502 = sshll.u32 [#allocation8], 4
          %s503 = int_to_ptr.vmem [resolvable:$true] %s502
          %508 = dma.hbm_to_vmem [thread:$0]  %s8, 512, %s503, [#allocation9], 128, 128, 8
        $region44: #{tpu_custom_call.1} parent=11 // pred_fallthru
          _
        // Predicated region
        $region45: #{tpu_custom_call.1} parent=11 // pred_check
          %p509 = pneg %p250
        $region46: #{tpu_custom_call.1} parent=11 // pred_check_branch
          %511 = sbr.rel (%p509) target = $region48
        $region47: #{tpu_custom_call.1} parent=11 // pred_region
          %s513 = ssub.s32 16, 16
          %514 = vsyncadd [#allocation9], %s513
          %s516 = sshll.u32 [#allocation10], 4
          %s517 = int_to_ptr.vmem [resolvable:$true] %s516
          %519 = dma.hbm_to_vmem [thread:$0]  %s9, 16, %s517, [#allocation9]
        $region48: #{tpu_custom_call.1} parent=11 // pred_fallthru
          _
        // Predicated region
        $region49: #{tpu_custom_call.1} parent=11 // pred_check
          %p520 = pneg %p271
        $region50: #{tpu_custom_call.1} parent=11 // pred_check_branch
          %522 = sbr.rel (%p520) target = $region52
        $region51: #{tpu_custom_call.1} parent=11 // pred_region
          %s524 = ssub.s32 16, 16
          %525 = vsyncadd [#allocation12], %s524
          %s527 = sshll.u32 [#allocation11], 4
          %s528 = int_to_ptr.vmem [resolvable:$true] %s527
          %530 = dma.hbm_to_vmem [thread:$0]  %s10, 16, %s528, [#allocation12]
        $region52: #{tpu_custom_call.1} parent=11 // pred_fallthru
          _
        // Predicated region
        $region53: #{tpu_custom_call.1} parent=11 // pred_check
          %p531 = pneg %p292
        $region54: #{tpu_custom_call.1} parent=11 // pred_check_branch
          %533 = sbr.rel (%p531) target = $region56
        $region55: #{tpu_custom_call.1} parent=11 // pred_region
          %s535 = ssub.s32 16, 16
          %536 = vsyncadd [#allocation12], %s535
          %s538 = sshll.u32 [#allocation13], 4
          %s539 = int_to_ptr.vmem [resolvable:$true] %s538
          %541 = dma.hbm_to_vmem [thread:$0]  %s11, 16, %s539, [#allocation12]
        $region56: #{tpu_custom_call.1} parent=11 // pred_fallthru
          _
        // Predicated region
        $region57: #{tpu_custom_call.1} parent=11 // pred_check
          %p542 = pneg %p313
        $region58: #{tpu_custom_call.1} parent=11 // pred_check_branch
          %544 = sbr.rel (%p542) target = $region60
        $region59: #{tpu_custom_call.1} parent=11 // pred_region
          _
        $region60: #{tpu_custom_call.1} parent=11 // pred_fallthru
          _
        // Predicated region
        $region61: #{tpu_custom_call.1} parent=11 // pred_check
          %p545 = pneg %p334
        $region62: #{tpu_custom_call.1} parent=11 // pred_check_branch
          %547 = sbr.rel (%p545) target = $region64
        $region63: #{tpu_custom_call.1} parent=11 // pred_region
          %s549 = ssub.s32 16, 16
          %550 = vsyncadd [#allocation15], %s549
          %s552 = sshll.u32 [#allocation14], 4
          %s553 = int_to_ptr.vmem [resolvable:$true] %s552
          %555 = dma.hbm_to_vmem [thread:$0]  %s13, 16, %s553, [#allocation15]
        $region64: #{tpu_custom_call.1} parent=11 // pred_fallthru
          _
        // Predicated region
        $region65: #{tpu_custom_call.1} parent=11 // pred_check
          %p556 = pneg %p355
        $region66: #{tpu_custom_call.1} parent=11 // pred_check_branch
          %558 = sbr.rel (%p556) target = $region68
        $region67: #{tpu_custom_call.1} parent=11 // pred_region
          %s560 = ssub.s32 16, 16
          %561 = vsyncadd [#allocation15], %s560
          %s563 = sshll.u32 [#allocation16], 4
          %s564 = int_to_ptr.vmem [resolvable:$true] %s563
          %566 = dma.hbm_to_vmem [thread:$0]  %s14, 16, %s564, [#allocation15]
        $region68: #{tpu_custom_call.1} parent=11 // pred_fallthru
          _
        // Predicated region
        $region69: #{tpu_custom_call.1} parent=11 // pred_check
          %p567 = pneg %p376
        $region70: #{tpu_custom_call.1} parent=11 // pred_check_branch
          %569 = sbr.rel (%p567) target = $region72
        $region71: #{tpu_custom_call.1} parent=11 // pred_region
          %s571 = ssub.s32 16, 16
          %572 = vsyncadd [#allocation18], %s571
          %s574 = sshll.u32 [#allocation17], 4
          %s575 = int_to_ptr.vmem [resolvable:$true] %s574
          %577 = dma.hbm_to_vmem [thread:$0]  %s15, 16, %s575, [#allocation18]
        $region72: #{tpu_custom_call.1} parent=11 // pred_fallthru
          _
        // Predicated region
        $region73: #{tpu_custom_call.1} parent=11 // pred_check
          %p578 = pneg %p397
        $region74: #{tpu_custom_call.1} parent=11 // pred_check_branch
          %580 = sbr.rel (%p578) target = $region76
        $region75: #{tpu_custom_call.1} parent=11 // pred_region
          %s582 = ssub.s32 512, 512
          %583 = vsyncadd [#allocation18], %s582
          %s584 = sshll.u32 [#allocation19], 4
          %s585 = int_to_ptr.vmem [resolvable:$true] %s584
          %590 = dma.hbm_to_vmem [thread:$0]  %s16, 512, %s585, [#allocation18], 128, 128, 8
        $region76: #{tpu_custom_call.1} parent=11 // pred_fallthru
          _
        // Predicated region
        $region77: #{tpu_custom_call.1} parent=11 // pred_check
          %p591 = pneg %p418
        $region78: #{tpu_custom_call.1} parent=11 // pred_check_branch
          %593 = sbr.rel (%p591) target = $region80
        $region79: #{tpu_custom_call.1} parent=11 // pred_region
          _
        $region80: #{tpu_custom_call.1} parent=11 // pred_fallthru
          _
      $region12: #{tpu_custom_call.1} parent=5 // pred_fallthru
        _
      %p594 = scmp.lt.s32.totalorder %s35, 2
      // Predicated region
      $region81: #{tpu_custom_call.1} parent=5 // pred_check
        %p595 = pneg %p594
      $region82: #{tpu_custom_call.1} parent=5 // pred_check_branch
        %597 = sbr.rel (%p595) target = $region84
      $region83: #{tpu_custom_call.1} parent=5 // pred_region
        // Predicated region
        $region85: #{tpu_custom_call.1} parent=83 // pred_check
          %p598 = pneg %p55
        $region86: #{tpu_custom_call.1} parent=83 // pred_check_branch
          %600 = sbr.rel (%p598) target = $region88
        $region87: #{tpu_custom_call.1} parent=83 // pred_region
          %s601 = sand.u32 %s45, 1
          %s602 = scalar_lea.sflag [#allocation3], %s601
          %s603 = sand.u32 %s45, 1
          %s604 = smul.addr %s603, 8
          %s605 = scalar_lea.vmem [#allocation2], %s604
          %s607 = ssub.s32 128, 128
          %608 = vsyncadd %s602, %s607
          %s609 = smul.addr %s35, 128
          %s610 = scalar_lea.hbm %s0, %s609
          %s612 = sshll.u32 %s605, 4
          %s613 = int_to_ptr.vmem [resolvable:$true] %s612
          %615 = dma.hbm_to_vmem [thread:$0]  %s610, 128, %s613, %s602
        $region88: #{tpu_custom_call.1} parent=83 // pred_fallthru
          _
      $region84: #{tpu_custom_call.1} parent=5 // pred_fallthru
        _
      %p616 = scmp.le.s32.totalorder 1, %s35
      %p617 = scmp.lt.s32.totalorder %s35, 3
      %p618 = pnand %p616, %p617
      %p619 = pneg %p618
      // Predicated region
      $region89: #{tpu_custom_call.1} parent=5 // pred_check
        _
      $region90: #{tpu_custom_call.1} parent=5 // pred_check_branch
        %621 = sbr.rel (%p618) target = $region92
      $region91: #{tpu_custom_call.1} parent=5 // pred_region
        %s622 = ssub.s32 %s35, 1
        %s623 = sand.u32 %s48, 1
        %s624 = scalar_lea.sflag [#allocation3], %s623
        %s625 = sand.u32 %s48, 1
        %s626 = smul.addr %s625, 8
        %s627 = scalar_lea.vmem [#allocation2], %s626
        // Predicated region
        $region93: #{tpu_custom_call.1} parent=91 // pred_check
          %p628 = pneg %p61
        $region94: #{tpu_custom_call.1} parent=91 // pred_check_branch
          %630 = sbr.rel (%p628) target = $region96
        $region95: #{tpu_custom_call.1} parent=91 // pred_region
          %631 = dma.done %s624, 128
        $region96: #{tpu_custom_call.1} parent=91 // pred_fallthru
          _
        // Predicated region
        $region97: #{tpu_custom_call.1} parent=91 // pred_check
          %p632 = pneg %p82
        $region98: #{tpu_custom_call.1} parent=91 // pred_check_branch
          %634 = sbr.rel (%p632) target = $region100
        $region99: #{tpu_custom_call.1} parent=91 // pred_region
          %635 = dma.done [#allocation6], 16
        $region100: #{tpu_custom_call.1} parent=91 // pred_fallthru
          _
        // Predicated region
        $region101: #{tpu_custom_call.1} parent=91 // pred_check
          %p636 = pneg %p103
        $region102: #{tpu_custom_call.1} parent=91 // pred_check_branch
          %638 = sbr.rel (%p636) target = $region104
        $region103: #{tpu_custom_call.1} parent=91 // pred_region
          %639 = dma.done [#allocation6], 16
        $region104: #{tpu_custom_call.1} parent=91 // pred_fallthru
          _
        // Predicated region
        $region105: #{tpu_custom_call.1} parent=91 // pred_check
          %p640 = pneg %p229
        $region106: #{tpu_custom_call.1} parent=91 // pred_check_branch
          %642 = sbr.rel (%p640) target = $region108
        $region107: #{tpu_custom_call.1} parent=91 // pred_region
          %643 = dma.done [#allocation9], 512
        $region108: #{tpu_custom_call.1} parent=91 // pred_fallthru
          _
        // Predicated region
        $region109: #{tpu_custom_call.1} parent=91 // pred_check
          %p644 = pneg %p250
        $region110: #{tpu_custom_call.1} parent=91 // pred_check_branch
          %646 = sbr.rel (%p644) target = $region112
        $region111: #{tpu_custom_call.1} parent=91 // pred_region
          %647 = dma.done [#allocation9], 16
        $region112: #{tpu_custom_call.1} parent=91 // pred_fallthru
          _
        // Predicated region
        $region113: #{tpu_custom_call.1} parent=91 // pred_check
          %p648 = pneg %p271
        $region114: #{tpu_custom_call.1} parent=91 // pred_check_branch
          %650 = sbr.rel (%p648) target = $region116
        $region115: #{tpu_custom_call.1} parent=91 // pred_region
          %651 = dma.done [#allocation12], 16
        $region116: #{tpu_custom_call.1} parent=91 // pred_fallthru
          _
        // Predicated region
        $region117: #{tpu_custom_call.1} parent=91 // pred_check
          %p652 = pneg %p292
        $region118: #{tpu_custom_call.1} parent=91 // pred_check_branch
          %654 = sbr.rel (%p652) target = $region120
        $region119: #{tpu_custom_call.1} parent=91 // pred_region
          %655 = dma.done [#allocation12], 16
        $region120: #{tpu_custom_call.1} parent=91 // pred_fallthru
          _
        // Predicated region
        $region121: #{tpu_custom_call.1} parent=91 // pred_check
          %p656 = pneg %p334
        $region122: #{tpu_custom_call.1} parent=91 // pred_check_branch
          %658 = sbr.rel (%p656) target = $region124
        $region123: #{tpu_custom_call.1} parent=91 // pred_region
          %659 = dma.done [#allocation15], 16
        $region124: #{tpu_custom_call.1} parent=91 // pred_fallthru
          _
        // Predicated region
        $region125: #{tpu_custom_call.1} parent=91 // pred_check
          %p660 = pneg %p355
        $region126: #{tpu_custom_call.1} parent=91 // pred_check_branch
          %662 = sbr.rel (%p660) target = $region128
        $region127: #{tpu_custom_call.1} parent=91 // pred_region
          %663 = dma.done [#allocation15], 16
        $region128: #{tpu_custom_call.1} parent=91 // pred_fallthru
          _
        // Predicated region
        $region129: #{tpu_custom_call.1} parent=91 // pred_check
          %p664 = pneg %p376
        $region130: #{tpu_custom_call.1} parent=91 // pred_check_branch
          %666 = sbr.rel (%p664) target = $region132
        $region131: #{tpu_custom_call.1} parent=91 // pred_region
          %667 = dma.done [#allocation18], 16
        $region132: #{tpu_custom_call.1} parent=91 // pred_fallthru
          _
        // Predicated region
        $region133: #{tpu_custom_call.1} parent=91 // pred_check
          %p668 = pneg %p397
        $region134: #{tpu_custom_call.1} parent=91 // pred_check_branch
          %670 = sbr.rel (%p668) target = $region136
        $region135: #{tpu_custom_call.1} parent=91 // pred_region
          %671 = dma.done [#allocation18], 512
        $region136: #{tpu_custom_call.1} parent=91 // pred_fallthru
          _
        %s672 = sand.u32 %s48, 1
        %s673 = scalar_lea.sflag [#allocation3], %s672
        %s674 = sand.u32 %s48, 1
        %s675 = smul.addr %s674, 8
        %s676 = scalar_lea.vmem [#allocation2], %s675
        %p677 = pneg %p61
        %p678 = pneg %p58
        %p679 = pneg %p82
        %p680 = pneg %p79
        %p681 = pneg %p103
        %p682 = pneg %p100
        %p683 = pneg %p124
        %p684 = pneg %p121
        %p685 = pneg %p145
        %p686 = pneg %p142
        %p687 = pneg %p166
        %p688 = pneg %p163
        %p689 = pneg %p187
        %p690 = pneg %p184
        %p691 = pneg %p208
        %p692 = pneg %p205
        %p693 = pneg %p229
        %p694 = pneg %p226
        %p695 = pneg %p250
        %p696 = pneg %p247
        %p697 = pneg %p271
        %p698 = pneg %p268
        %p699 = pneg %p292
        %p700 = pneg %p289
        %p701 = pneg %p313
        %p702 = pneg %p310
        %p703 = pneg %p334
        %p704 = pneg %p331
        %p705 = pneg %p355
        %p706 = pneg %p352
        %p707 = pneg %p376
        %p708 = pneg %p373
        %p709 = pneg %p397
        %p710 = pneg %p394
        %p711 = pneg %p418
        %p712 = pneg %p415
        %p713 = pneg %p444
        %p714 = pneg %p441
        %s715 = sand.u32 %s431, 1
        %s716 = scalar_lea.sflag [#allocation4], %s715
        %s717 = sand.u32 %s431, 1
        %s718 = smul.addr %s717, 8
        %s719 = scalar_lea.vmem [#allocation20], %s718
        %v720 = vld [vmem:[%s627] sm:$0xff]
        %v721 = vld [vmem:[#allocation5] sm:$0x1]
        %v722 = vld [vmem:[#allocation7] sm:$0x1]
        %vm723 = vcmask 261120
        %v724 = vsel %vm723, %v720, 0.0
        %725 = vadd.xlane.f32.xlu0 %v724
        %v726 = vpop.xlane.xlu0 %725
        %v727 = vrcp.pop 32.0
        %v728 = vmul.f32 %v726, %v727
        %v729 = vsub.f32 %v720, %v728
        %v730 = vmul.f32 %v729, %v729
        %v731 = vsel %vm723, %v730, 0.0
        %732 = vadd.xlane.f32.xlu0 %v731
        %v733 = vpop.xlane.xlu0 %732
        %v734 = vmul.f32 %v733, %v727
        %v735 = vadd.f32 %v734, 1e-05
        %v736 = vrsqrt.pop %v735
        %v737 = vmul.f32 %v729, %v736
        %v739 = vlaneseq
        %v740 = vshrl.u32 %v739, 7
        %v741 = vsub.s32 0, %v740
        %v742 = vrot.slane %v721, %v741
        %v744 = vmul.f32 %v737, %v742
        %v746 = vlaneseq
        %v747 = vshrl.u32 %v746, 7
        %v748 = vsub.s32 0, %v747
        %v749 = vrot.slane %v722, %v748
        %v751 = vadd.f32 %v744, %v749
        %v752 = vld [vmem:[%s3] sm:$0xff]
        %v753 = vld [vmem:[%s3 + $0x8] sm:$0xff]
        %v754 = vld [vmem:[%s3 + $0x10] sm:$0xff]
        %v755 = vld [vmem:[%s3 + $0x18] sm:$0xff]
        %v757 = vsel %vm723, %v751, 0
        %759 = vmatprep.subr.mxu0 0.0
        %760 = vmatpush1.msra.mxu0 %v752
        %761 = vmatprep.subr.mxu0 0.0
        %762 = vmatpush1.msra.mxu0 %v753
        %763 = vmatprep.subr.mxu0 0.0
        %764 = vmatpush1.msra.mxu0 %v754
        %765 = vmatprep.subr.mxu0 0.0
        %766 = vmatpush1.msra.mxu0 %v755
        %767 = vmatprep.subr.mxu0 0.0
        %768 = vmatpush1.msra.mxu0 0.0
        %769 = vmatprep.subr.mxu0 0.0
        %770 = vmatpush1.msra.mxu0 0.0
        %771 = vmatprep.subr.mxu0 0.0
        %772 = vmatpush1.msra.mxu0 0.0
        %773 = vmatprep.subr.mxu0 0.0
        %774 = vmatpush1.msra.mxu0 0.0
        %775 = vmatprep.subr.mxu0 0.0
        %776 = vmatpush1.msra.mxu0 0.0
        %777 = vmatprep.subr.mxu0 0.0
        %778 = vmatpush1.msra.mxu0 0.0
        %779 = vmatprep.subr.mxu0 0.0
        %780 = vmatpush1.msra.mxu0 0.0
        %781 = vmatprep.subr.mxu0 0.0
        %782 = vmatpush1.msra.mxu0 0.0
        %783 = vmatprep.subr.mxu0 0.0
        %784 = vmatpush1.msra.mxu0 0.0
        %785 = vmatprep.subr.mxu0 0.0
        %786 = vmatpush1.msra.mxu0 0.0
        %787 = vmatprep.subr.mxu0 0.0
        %788 = vmatpush1.msra.mxu0 0.0
        %789 = vmatprep.subr.mxu0 0.0
        %790 = vmatpush1.msra.mxu0 0.0
        %791 = vmatprep.subr.mxu0 0.0
        %792 = vmatpush1.msra.mxu0 0.0
        %793 = vmatprep.subr.mxu0 0.0
        %794 = vmatpush1.msra.mxu0 0.0
        %795 = vmatprep.subr.mxu0 0.0
        %796 = vmatpush1.msra.mxu0 0.0
        %797 = vmatprep.subr.mxu0 0.0
        %798 = vmatpush1.msra.mxu0 0.0
        %799 = vmatprep.subr.mxu0 0.0
        %800 = vmatpush1.msra.mxu0 0.0
        %801 = vmatprep.subr.mxu0 0.0
        %802 = vmatpush1.msra.mxu0 0.0
        %803 = vmatprep.subr.mxu0 0.0
        %804 = vmatpush1.msra.mxu0 0.0
        %805 = vmatprep.subr.mxu0 0.0
        %806 = vmatpush1.msra.mxu0 0.0
        %807 = vmatprep.subr.mxu0 0.0
        %808 = vmatpush1.msra.mxu0 0.0
        %809 = vmatprep.subr.mxu0 0.0
        %810 = vmatpush1.msra.mxu0 0.0
        %811 = vmatprep.subr.mxu0 0.0
        %812 = vmatpush1.msra.mxu0 0.0
        %813 = vmatprep.subr.mxu0 0.0
        %814 = vmatpush1.msra.mxu0 0.0
        %815 = vmatprep.subr.mxu0 0.0
        %816 = vmatpush1.msra.mxu0 0.0
        %817 = vmatprep.subr.mxu0 0.0
        %818 = vmatpush1.msra.mxu0 0.0
        %819 = vmatprep.subr.mxu0 0.0
        %820 = vmatpush1.msra.mxu0 0.0
        %821 = vmatprep.subr.mxu0 0.0
        %822 = vmatpush1.msra.mxu0 0.0
        %823 = vmatprep.mubr.f32.mxu0 0.0
        %824 = vmatmul.mubr.f32.gmra.mrb[0].mxu0 %v757
        %v825 = vpop.f32.mrb[0].mxu0
        %v826 = vadd.f32 0.0, %v825
        %v827 = vpop.f32.mrb[0].mxu0
        %828 = vdwg.mxu0
        %v829 = vld [vmem:[%s4] sm:$0xff]
        %v830 = vld [vmem:[%s4 + $0x8] sm:$0xff]
        %v831 = vld [vmem:[%s4 + $0x10] sm:$0xff]
        %v832 = vld [vmem:[%s4 + $0x18] sm:$0xff]
        %833 = vmatprep.subr.mxu0 0.0
        %834 = vmatpush1.msra.mxu0 %v829
        %835 = vmatprep.subr.mxu0 0.0
        %836 = vmatpush1.msra.mxu0 %v830
        %837 = vmatprep.subr.mxu0 0.0
        %838 = vmatpush1.msra.mxu0 %v831
        %839 = vmatprep.subr.mxu0 0.0
        %840 = vmatpush1.msra.mxu0 %v832
        %841 = vmatprep.subr.mxu0 0.0
        %842 = vmatpush1.msra.mxu0 0.0
        %843 = vmatprep.subr.mxu0 0.0
        %844 = vmatpush1.msra.mxu0 0.0
        %845 = vmatprep.subr.mxu0 0.0
        %846 = vmatpush1.msra.mxu0 0.0
        %847 = vmatprep.subr.mxu0 0.0
        %848 = vmatpush1.msra.mxu0 0.0
        %849 = vmatprep.subr.mxu0 0.0
        %850 = vmatpush1.msra.mxu0 0.0
        %851 = vmatprep.subr.mxu0 0.0
        %852 = vmatpush1.msra.mxu0 0.0
        %853 = vmatprep.subr.mxu0 0.0
        %854 = vmatpush1.msra.mxu0 0.0
        %855 = vmatprep.subr.mxu0 0.0
        %856 = vmatpush1.msra.mxu0 0.0
        %857 = vmatprep.subr.mxu0 0.0
        %858 = vmatpush1.msra.mxu0 0.0
        %859 = vmatprep.subr.mxu0 0.0
        %860 = vmatpush1.msra.mxu0 0.0
        %861 = vmatprep.subr.mxu0 0.0
        %862 = vmatpush1.msra.mxu0 0.0
        %863 = vmatprep.subr.mxu0 0.0
        %864 = vmatpush1.msra.mxu0 0.0
        %865 = vmatprep.subr.mxu0 0.0
        %866 = vmatpush1.msra.mxu0 0.0
        %867 = vmatprep.subr.mxu0 0.0
        %868 = vmatpush1.msra.mxu0 0.0
        %869 = vmatprep.subr.mxu0 0.0
        %870 = vmatpush1.msra.mxu0 0.0
        %871 = vmatprep.subr.mxu0 0.0
        %872 = vmatpush1.msra.mxu0 0.0
        %873 = vmatprep.subr.mxu0 0.0
        %874 = vmatpush1.msra.mxu0 0.0
        %875 = vmatprep.subr.mxu0 0.0
        %876 = vmatpush1.msra.mxu0 0.0
        %877 = vmatprep.subr.mxu0 0.0
        %878 = vmatpush1.msra.mxu0 0.0
        %879 = vmatprep.subr.mxu0 0.0
        %880 = vmatpush1.msra.mxu0 0.0
        %881 = vmatprep.subr.mxu0 0.0
        %882 = vmatpush1.msra.mxu0 0.0
        %883 = vmatprep.subr.mxu0 0.0
        %884 = vmatpush1.msra.mxu0 0.0
        %885 = vmatprep.subr.mxu0 0.0
        %886 = vmatpush1.msra.mxu0 0.0
        %887 = vmatprep.subr.mxu0 0.0
        %888 = vmatpush1.msra.mxu0 0.0
        %889 = vmatprep.subr.mxu0 0.0
        %890 = vmatpush1.msra.mxu0 0.0
        %891 = vmatprep.subr.mxu0 0.0
        %892 = vmatpush1.msra.mxu0 0.0
        %893 = vmatprep.subr.mxu0 0.0
        %894 = vmatpush1.msra.mxu0 0.0
        %895 = vmatprep.subr.mxu0 0.0
        %896 = vmatpush1.msra.mxu0 0.0
        %897 = vmatprep.mubr.f32.mxu0 0.0
        %898 = vmatmul.mubr.f32.gmra.mrb[0].mxu0 %v757
        %v899 = vpop.f32.mrb[0].mxu0
        %v900 = vadd.f32 0.0, %v899
        %v901 = vpop.f32.mrb[0].mxu0
        %902 = vdwg.mxu0
        %v903 = vld [vmem:[%s5] sm:$0xff]
        %v904 = vld [vmem:[%s5 + $0x8] sm:$0xff]
        %v905 = vld [vmem:[%s5 + $0x10] sm:$0xff]
        %v906 = vld [vmem:[%s5 + $0x18] sm:$0xff]
        %907 = vmatprep.subr.mxu0 0.0
        %908 = vmatpush1.msra.mxu0 %v903
        %909 = vmatprep.subr.mxu0 0.0
        %910 = vmatpush1.msra.mxu0 %v904
        %911 = vmatprep.subr.mxu0 0.0
        %912 = vmatpush1.msra.mxu0 %v905
        %913 = vmatprep.subr.mxu0 0.0
        %914 = vmatpush1.msra.mxu0 %v906
        %915 = vmatprep.subr.mxu0 0.0
        %916 = vmatpush1.msra.mxu0 0.0
        %917 = vmatprep.subr.mxu0 0.0
        %918 = vmatpush1.msra.mxu0 0.0
        %919 = vmatprep.subr.mxu0 0.0
        %920 = vmatpush1.msra.mxu0 0.0
        %921 = vmatprep.subr.mxu0 0.0
        %922 = vmatpush1.msra.mxu0 0.0
        %923 = vmatprep.subr.mxu0 0.0
        %924 = vmatpush1.msra.mxu0 0.0
        %925 = vmatprep.subr.mxu0 0.0
        %926 = vmatpush1.msra.mxu0 0.0
        %927 = vmatprep.subr.mxu0 0.0
        %928 = vmatpush1.msra.mxu0 0.0
        %929 = vmatprep.subr.mxu0 0.0
        %930 = vmatpush1.msra.mxu0 0.0
        %931 = vmatprep.subr.mxu0 0.0
        %932 = vmatpush1.msra.mxu0 0.0
        %933 = vmatprep.subr.mxu0 0.0
        %934 = vmatpush1.msra.mxu0 0.0
        %935 = vmatprep.subr.mxu0 0.0
        %936 = vmatpush1.msra.mxu0 0.0
        %937 = vmatprep.subr.mxu0 0.0
        %938 = vmatpush1.msra.mxu0 0.0
        %939 = vmatprep.subr.mxu0 0.0
        %940 = vmatpush1.msra.mxu0 0.0
        %941 = vmatprep.subr.mxu0 0.0
        %942 = vmatpush1.msra.mxu0 0.0
        %943 = vmatprep.subr.mxu0 0.0
        %944 = vmatpush1.msra.mxu0 0.0
        %945 = vmatprep.subr.mxu0 0.0
        %946 = vmatpush1.msra.mxu0 0.0
        %947 = vmatprep.subr.mxu0 0.0
        %948 = vmatpush1.msra.mxu0 0.0
        %949 = vmatprep.subr.mxu0 0.0
        %950 = vmatpush1.msra.mxu0 0.0
        %951 = vmatprep.subr.mxu0 0.0
        %952 = vmatpush1.msra.mxu0 0.0
        %953 = vmatprep.subr.mxu0 0.0
        %954 = vmatpush1.msra.mxu0 0.0
        %955 = vmatprep.subr.mxu0 0.0
        %956 = vmatpush1.msra.mxu0 0.0
        %957 = vmatprep.subr.mxu0 0.0
        %958 = vmatpush1.msra.mxu0 0.0
        %959 = vmatprep.subr.mxu0 0.0
        %960 = vmatpush1.msra.mxu0 0.0
        %961 = vmatprep.subr.mxu0 0.0
        %962 = vmatpush1.msra.mxu0 0.0
        %963 = vmatprep.subr.mxu0 0.0
        %964 = vmatpush1.msra.mxu0 0.0
        %965 = vmatprep.subr.mxu0 0.0
        %966 = vmatpush1.msra.mxu0 0.0
        %967 = vmatprep.subr.mxu0 0.0
        %968 = vmatpush1.msra.mxu0 0.0
        %969 = vmatprep.subr.mxu0 0.0
        %970 = vmatpush1.msra.mxu0 0.0
        %971 = vmatprep.mubr.f32.mxu0 0.0
        %972 = vmatmul.mubr.f32.gmra.mrb[0].mxu0 %v757
        %v973 = vpop.f32.mrb[0].mxu0
        %v974 = vadd.f32 0.0, %v973
        %v975 = vpop.f32.mrb[0].mxu0
        %976 = vdwg.mxu0
        %v977 = vld [vmem:[%s6] sm:$0xff]
        %v978 = vld [vmem:[%s6 + $0x8] sm:$0xff]
        %v979 = vld [vmem:[%s6 + $0x10] sm:$0xff]
        %v980 = vld [vmem:[%s6 + $0x18] sm:$0xff]
        %v981 = vld [vmem:[#allocation10] sm:$0x1]
        %v983 = vlaneseq
        %v984 = vshrl.u32 %v983, 7
        %v985 = vsub.s32 0, %v984
        %v986 = vrot.slane %v981, %v985
        %v989 = vsel %vm723, %v826, 0
        %991 = vmatprep.subr.mxu0 0.0
        %992 = vmatpush1.msra.mxu0 %v977
        %993 = vmatprep.subr.mxu0 0.0
        %994 = vmatpush1.msra.mxu0 %v978
        %995 = vmatprep.subr.mxu0 0.0
        %996 = vmatpush1.msra.mxu0 %v979
        %997 = vmatprep.subr.mxu0 0.0
        %998 = vmatpush1.msra.mxu0 %v980
        %999 = vmatprep.subr.mxu0 0.0
        %1000 = vmatpush1.msra.mxu0 0.0
        %1001 = vmatprep.subr.mxu0 0.0
        %1002 = vmatpush1.msra.mxu0 0.0
        %1003 = vmatprep.subr.mxu0 0.0
        %1004 = vmatpush1.msra.mxu0 0.0
        %1005 = vmatprep.subr.mxu0 0.0
        %1006 = vmatpush1.msra.mxu0 0.0
        %1007 = vmatprep.subr.mxu0 0.0
        %1008 = vmatpush1.msra.mxu0 0.0
        %1009 = vmatprep.subr.mxu0 0.0
        %1010 = vmatpush1.msra.mxu0 0.0
        %1011 = vmatprep.subr.mxu0 0.0
        %1012 = vmatpush1.msra.mxu0 0.0
        %1013 = vmatprep.subr.mxu0 0.0
        %1014 = vmatpush1.msra.mxu0 0.0
        %1015 = vmatprep.subr.mxu0 0.0
        %1016 = vmatpush1.msra.mxu0 0.0
        %1017 = vmatprep.subr.mxu0 0.0
        %1018 = vmatpush1.msra.mxu0 0.0
        %1019 = vmatprep.subr.mxu0 0.0
        %1020 = vmatpush1.msra.mxu0 0.0
        %1021 = vmatprep.subr.mxu0 0.0
        %1022 = vmatpush1.msra.mxu0 0.0
        %1023 = vmatprep.subr.mxu0 0.0
        %1024 = vmatpush1.msra.mxu0 0.0
        %1025 = vmatprep.subr.mxu0 0.0
        %1026 = vmatpush1.msra.mxu0 0.0
        %1027 = vmatprep.subr.mxu0 0.0
        %1028 = vmatpush1.msra.mxu0 0.0
        %1029 = vmatprep.subr.mxu0 0.0
        %1030 = vmatpush1.msra.mxu0 0.0
        %1031 = vmatprep.subr.mxu0 0.0
        %1032 = vmatpush1.msra.mxu0 0.0
        %1033 = vmatprep.subr.mxu0 0.0
        %1034 = vmatpush1.msra.mxu0 0.0
        %1035 = vmatprep.subr.mxu0 0.0
        %1036 = vmatpush1.msra.mxu0 0.0
        %1037 = vmatprep.subr.mxu0 0.0
        %1038 = vmatpush1.msra.mxu0 0.0
        %1039 = vmatprep.subr.mxu0 0.0
        %1040 = vmatpush1.msra.mxu0 0.0
        %1041 = vmatprep.subr.mxu0 0.0
        %1042 = vmatpush1.msra.mxu0 0.0
        %1043 = vmatprep.subr.mxu0 0.0
        %1044 = vmatpush1.msra.mxu0 0.0
        %1045 = vmatprep.subr.mxu0 0.0
        %1046 = vmatpush1.msra.mxu0 0.0
        %1047 = vmatprep.subr.mxu0 0.0
        %1048 = vmatpush1.msra.mxu0 0.0
        %1049 = vmatprep.subr.mxu0 0.0
        %1050 = vmatpush1.msra.mxu0 0.0
        %1051 = vmatprep.subr.mxu0 0.0
        %1052 = vmatpush1.msra.mxu0 0.0
        %1053 = vmatprep.subr.mxu0 0.0
        %1054 = vmatpush1.msra.mxu0 0.0
        %1055 = vmatprep.mubr.f32.mxu0 0.0
        %1056 = vmatmul.mubr.f32.gmra.mrb[0].mxu0 %v989
        %v1057 = vpop.f32.mrb[0].mxu0
        %v1058 = vadd.f32 %v986, %v1057
        %v1059 = vpop.f32.mrb[0].mxu0
        %1060 = vdwg.mxu0
        %v1061 = vld [vmem:[%s7] sm:$0xff]
        %v1062 = vld [vmem:[%s7 + $0x8] sm:$0xff]
        %v1063 = vld [vmem:[%s7 + $0x10] sm:$0xff]
        %v1064 = vld [vmem:[%s7 + $0x18] sm:$0xff]
        %v1065 = vld [vmem:[#allocation11] sm:$0x1]
        %v1067 = vlaneseq
        %v1068 = vshrl.u32 %v1067, 7
        %v1069 = vsub.s32 0, %v1068
        %v1070 = vrot.slane %v1065, %v1069
        %v1073 = vsel %vm723, %v900, 0
        %1075 = vmatprep.subr.mxu0 0.0
        %1076 = vmatpush1.msra.mxu0 %v1061
        %1077 = vmatprep.subr.mxu0 0.0
        %1078 = vmatpush1.msra.mxu0 %v1062
        %1079 = vmatprep.subr.mxu0 0.0
        %1080 = vmatpush1.msra.mxu0 %v1063
        %1081 = vmatprep.subr.mxu0 0.0
        %1082 = vmatpush1.msra.mxu0 %v1064
        %1083 = vmatprep.subr.mxu0 0.0
        %1084 = vmatpush1.msra.mxu0 0.0
        %1085 = vmatprep.subr.mxu0 0.0
        %1086 = vmatpush1.msra.mxu0 0.0
        %1087 = vmatprep.subr.mxu0 0.0
        %1088 = vmatpush1.msra.mxu0 0.0
        %1089 = vmatprep.subr.mxu0 0.0
        %1090 = vmatpush1.msra.mxu0 0.0
        %1091 = vmatprep.subr.mxu0 0.0
        %1092 = vmatpush1.msra.mxu0 0.0
        %1093 = vmatprep.subr.mxu0 0.0
        %1094 = vmatpush1.msra.mxu0 0.0
        %1095 = vmatprep.subr.mxu0 0.0
        %1096 = vmatpush1.msra.mxu0 0.0
        %1097 = vmatprep.subr.mxu0 0.0
        %1098 = vmatpush1.msra.mxu0 0.0
        %1099 = vmatprep.subr.mxu0 0.0
        %1100 = vmatpush1.msra.mxu0 0.0
        %1101 = vmatprep.subr.mxu0 0.0
        %1102 = vmatpush1.msra.mxu0 0.0
        %1103 = vmatprep.subr.mxu0 0.0
        %1104 = vmatpush1.msra.mxu0 0.0
        %1105 = vmatprep.subr.mxu0 0.0
        %1106 = vmatpush1.msra.mxu0 0.0
        %1107 = vmatprep.subr.mxu0 0.0
        %1108 = vmatpush1.msra.mxu0 0.0
        %1109 = vmatprep.subr.mxu0 0.0
        %1110 = vmatpush1.msra.mxu0 0.0
        %1111 = vmatprep.subr.mxu0 0.0
        %1112 = vmatpush1.msra.mxu0 0.0
        %1113 = vmatprep.subr.mxu0 0.0
        %1114 = vmatpush1.msra.mxu0 0.0
        %1115 = vmatprep.subr.mxu0 0.0
        %1116 = vmatpush1.msra.mxu0 0.0
        %1117 = vmatprep.subr.mxu0 0.0
        %1118 = vmatpush1.msra.mxu0 0.0
        %1119 = vmatprep.subr.mxu0 0.0
        %1120 = vmatpush1.msra.mxu0 0.0
        %1121 = vmatprep.subr.mxu0 0.0
        %1122 = vmatpush1.msra.mxu0 0.0
        %1123 = vmatprep.subr.mxu0 0.0
        %1124 = vmatpush1.msra.mxu0 0.0
        %1125 = vmatprep.subr.mxu0 0.0
        %1126 = vmatpush1.msra.mxu0 0.0
        %1127 = vmatprep.subr.mxu0 0.0
        %1128 = vmatpush1.msra.mxu0 0.0
        %1129 = vmatprep.subr.mxu0 0.0
        %1130 = vmatpush1.msra.mxu0 0.0
        %1131 = vmatprep.subr.mxu0 0.0
        %1132 = vmatpush1.msra.mxu0 0.0
        %1133 = vmatprep.subr.mxu0 0.0
        %1134 = vmatpush1.msra.mxu0 0.0
        %1135 = vmatprep.subr.mxu0 0.0
        %1136 = vmatpush1.msra.mxu0 0.0
        %1137 = vmatprep.subr.mxu0 0.0
        %1138 = vmatpush1.msra.mxu0 0.0
        %1139 = vmatprep.mubr.f32.mxu0 0.0
        %1140 = vmatmul.mubr.f32.gmra.mrb[0].mxu0 %v1073
        %v1141 = vpop.f32.mrb[0].mxu0
        %v1142 = vadd.f32 %v1070, %v1141
        %v1143 = vpop.f32.mrb[0].mxu0
        %1144 = vdwg.mxu0
        %v1145 = vld [vmem:[#allocation8] sm:$0xff]
        %v1146 = vld [vmem:[#allocation8 + $0x8] sm:$0xff]
        %v1147 = vld [vmem:[#allocation8 + $0x10] sm:$0xff]
        %v1148 = vld [vmem:[#allocation8 + $0x18] sm:$0xff]
        %v1149 = vld [vmem:[#allocation13] sm:$0x1]
        %v1151 = vlaneseq
        %v1152 = vshrl.u32 %v1151, 7
        %v1153 = vsub.s32 0, %v1152
        %v1154 = vrot.slane %v1149, %v1153
        %v1157 = vsel %vm723, %v974, 0
        %1159 = vmatprep.subr.mxu0 0.0
        %1160 = vmatpush1.msra.mxu0 %v1145
        %1161 = vmatprep.subr.mxu0 0.0
        %1162 = vmatpush1.msra.mxu0 %v1146
        %1163 = vmatprep.subr.mxu0 0.0
        %1164 = vmatpush1.msra.mxu0 %v1147
        %1165 = vmatprep.subr.mxu0 0.0
        %1166 = vmatpush1.msra.mxu0 %v1148
        %1167 = vmatprep.subr.mxu0 0.0
        %1168 = vmatpush1.msra.mxu0 0.0
        %1169 = vmatprep.subr.mxu0 0.0
        %1170 = vmatpush1.msra.mxu0 0.0
        %1171 = vmatprep.subr.mxu0 0.0
        %1172 = vmatpush1.msra.mxu0 0.0
        %1173 = vmatprep.subr.mxu0 0.0
        %1174 = vmatpush1.msra.mxu0 0.0
        %1175 = vmatprep.subr.mxu0 0.0
        %1176 = vmatpush1.msra.mxu0 0.0
        %1177 = vmatprep.subr.mxu0 0.0
        %1178 = vmatpush1.msra.mxu0 0.0
        %1179 = vmatprep.subr.mxu0 0.0
        %1180 = vmatpush1.msra.mxu0 0.0
        %1181 = vmatprep.subr.mxu0 0.0
        %1182 = vmatpush1.msra.mxu0 0.0
        %1183 = vmatprep.subr.mxu0 0.0
        %1184 = vmatpush1.msra.mxu0 0.0
        %1185 = vmatprep.subr.mxu0 0.0
        %1186 = vmatpush1.msra.mxu0 0.0
        %1187 = vmatprep.subr.mxu0 0.0
        %1188 = vmatpush1.msra.mxu0 0.0
        %1189 = vmatprep.subr.mxu0 0.0
        %1190 = vmatpush1.msra.mxu0 0.0
        %1191 = vmatprep.subr.mxu0 0.0
        %1192 = vmatpush1.msra.mxu0 0.0
        %1193 = vmatprep.subr.mxu0 0.0
        %1194 = vmatpush1.msra.mxu0 0.0
        %1195 = vmatprep.subr.mxu0 0.0
        %1196 = vmatpush1.msra.mxu0 0.0
        %1197 = vmatprep.subr.mxu0 0.0
        %1198 = vmatpush1.msra.mxu0 0.0
        %1199 = vmatprep.subr.mxu0 0.0
        %1200 = vmatpush1.msra.mxu0 0.0
        %1201 = vmatprep.subr.mxu0 0.0
        %1202 = vmatpush1.msra.mxu0 0.0
        %1203 = vmatprep.subr.mxu0 0.0
        %1204 = vmatpush1.msra.mxu0 0.0
        %1205 = vmatprep.subr.mxu0 0.0
        %1206 = vmatpush1.msra.mxu0 0.0
        %1207 = vmatprep.subr.mxu0 0.0
        %1208 = vmatpush1.msra.mxu0 0.0
        %1209 = vmatprep.subr.mxu0 0.0
        %1210 = vmatpush1.msra.mxu0 0.0
        %1211 = vmatprep.subr.mxu0 0.0
        %1212 = vmatpush1.msra.mxu0 0.0
        %1213 = vmatprep.subr.mxu0 0.0
        %1214 = vmatpush1.msra.mxu0 0.0
        %1215 = vmatprep.subr.mxu0 0.0
        %1216 = vmatpush1.msra.mxu0 0.0
        %1217 = vmatprep.subr.mxu0 0.0
        %1218 = vmatpush1.msra.mxu0 0.0
        %1219 = vmatprep.subr.mxu0 0.0
        %1220 = vmatpush1.msra.mxu0 0.0
        %1221 = vmatprep.subr.mxu0 0.0
        %1222 = vmatpush1.msra.mxu0 0.0
        %1223 = vmatprep.mubr.f32.mxu0 0.0
        %1224 = vmatmul.mubr.f32.gmra.mrb[0].mxu0 %v1157
        %v1225 = vpop.f32.mrb[0].mxu0
        %v1226 = vadd.f32 %v1154, %v1225
        %v1227 = vpop.f32.mrb[0].mxu0
        %1228 = vdwg.mxu0
        %v1229 = vld [vmem:[%s12] sm:$0xff]
        %v1230 = vld [vmem:[%s12 + $0x8] sm:$0xff]
        %v1231 = vld [vmem:[%s12 + $0x10] sm:$0xff]
        %v1232 = vld [vmem:[%s12 + $0x18] sm:$0xff]
        %vm1233 = vcmask 64512
        %v1235 = vsel %vm1233, %v1058, 0
        %v1238 = vsel %vm1233, %v1142, 0
        %1240 = vmatprep.subr.mxu0 0.0
        %1241 = vmatpush1.xpose.msra.mxu0 %v1238
        %1242 = vmatprep.subr.mxu0 0.0
        %1243 = vmatpush1.xpose.msra.mxu0 0.0
        %1244 = vmatprep.subr.mxu0 0.0
        %1245 = vmatpush1.xpose.msra.mxu0 0.0
        %1246 = vmatprep.subr.mxu0 0.0
        %1247 = vmatpush1.xpose.msra.mxu0 0.0
        %1248 = vmatprep.subr.mxu0 0.0
        %1249 = vmatpush1.xpose.msra.mxu0 0.0
        %1250 = vmatprep.subr.mxu0 0.0
        %1251 = vmatpush1.xpose.msra.mxu0 0.0
        %1252 = vmatprep.subr.mxu0 0.0
        %1253 = vmatpush1.xpose.msra.mxu0 0.0
        %1254 = vmatprep.subr.mxu0 0.0
        %1255 = vmatpush1.xpose.msra.mxu0 0.0
        %1256 = vmatprep.subr.mxu0 0.0
        %1257 = vmatpush1.xpose.msra.mxu0 0.0
        %1258 = vmatprep.subr.mxu0 0.0
        %1259 = vmatpush1.xpose.msra.mxu0 0.0
        %1260 = vmatprep.subr.mxu0 0.0
        %1261 = vmatpush1.xpose.msra.mxu0 0.0
        %1262 = vmatprep.subr.mxu0 0.0
        %1263 = vmatpush1.xpose.msra.mxu0 0.0
        %1264 = vmatprep.subr.mxu0 0.0
        %1265 = vmatpush1.xpose.msra.mxu0 0.0
        %1266 = vmatprep.subr.mxu0 0.0
        %1267 = vmatpush1.xpose.msra.mxu0 0.0
        %1268 = vmatprep.subr.mxu0 0.0
        %1269 = vmatpush1.xpose.msra.mxu0 0.0
        %1270 = vmatprep.subr.mxu0 0.0
        %1271 = vmatpush1.xpose.msra.mxu0 0.0
        %1272 = vmatprep.subr.mxu0 0.0
        %1273 = vmatpush1.xpose.msra.mxu0 0.0
        %1274 = vmatprep.subr.mxu0 0.0
        %1275 = vmatpush1.xpose.msra.mxu0 0.0
        %1276 = vmatprep.subr.mxu0 0.0
        %1277 = vmatpush1.xpose.msra.mxu0 0.0
        %1278 = vmatprep.subr.mxu0 0.0
        %1279 = vmatpush1.xpose.msra.mxu0 0.0
        %1280 = vmatprep.subr.mxu0 0.0
        %1281 = vmatpush1.xpose.msra.mxu0 0.0
        %1282 = vmatprep.subr.mxu0 0.0
        %1283 = vmatpush1.xpose.msra.mxu0 0.0
        %1284 = vmatprep.subr.mxu0 0.0
        %1285 = vmatpush1.xpose.msra.mxu0 0.0
        %1286 = vmatprep.subr.mxu0 0.0
        %1287 = vmatpush1.xpose.msra.mxu0 0.0
        %1288 = vmatprep.subr.mxu0 0.0
        %1289 = vmatpush1.xpose.msra.mxu0 0.0
        %1290 = vmatprep.subr.mxu0 0.0
        %1291 = vmatpush1.xpose.msra.mxu0 0.0
        %1292 = vmatprep.subr.mxu0 0.0
        %1293 = vmatpush1.xpose.msra.mxu0 0.0
        %1294 = vmatprep.subr.mxu0 0.0
        %1295 = vmatpush1.xpose.msra.mxu0 0.0
        %1296 = vmatprep.subr.mxu0 0.0
        %1297 = vmatpush1.xpose.msra.mxu0 0.0
        %1298 = vmatprep.subr.mxu0 0.0
        %1299 = vmatpush1.xpose.msra.mxu0 0.0
        %1300 = vmatprep.subr.mxu0 0.0
        %1301 = vmatpush1.xpose.msra.mxu0 0.0
        %1302 = vmatprep.subr.mxu0 0.0
        %1303 = vmatpush1.xpose.msra.mxu0 0.0
        %1304 = vmatprep.mubr.f32.mxu0 0.0
        %1305 = vmatmul.mubr.f32.gmra.mrb[0].mxu0 %v1235
        %v1306 = vpop.f32.mrb[0].mxu0
        %v1307 = vadd.f32 0.0, %v1306
        %v1308 = vpop.f32.mrb[0].mxu0
        %1309 = vdwg.mxu0
        %v1310 = vmul.f32 %v1307, 0.35355338
        %v1311 = vsel %vm1233, %v1310, -inf
        %1312 = vmax.xlane.f32.xlu0 %v1311
        %v1313 = vpop.xlane.xlu0 %1312
        %v1314 = vsub.f32 %v1310, %v1313
        %v1315 = vmul.f32 %v1314, 1.442695
        %v1316 = vpow.pop %v1315
        %v1317 = vsel %vm1233, %v1316, 0.0
        %1318 = vadd.xlane.f32.xlu0 %v1317
        %v1319 = vpop.xlane.xlu0 %1318
        %v1320 = vrcp.pop %v1319
        %v1321 = vmul.f32 %v1316, %v1320
        %v1323 = vsel %vm1233, %v1321, 0
        %1325 = vmatprep.subr.mxu0 0.0
        %1326 = vmatpush1.msra.mxu0 %v1226
        %1327 = vmatprep.subr.mxu0 0.0
        %1328 = vmatpush1.msra.mxu0 0.0
        %1329 = vmatprep.subr.mxu0 0.0
        %1330 = vmatpush1.msra.mxu0 0.0
        %1331 = vmatprep.subr.mxu0 0.0
        %1332 = vmatpush1.msra.mxu0 0.0
        %1333 = vmatprep.subr.mxu0 0.0
        %1334 = vmatpush1.msra.mxu0 0.0
        %1335 = vmatprep.subr.mxu0 0.0
        %1336 = vmatpush1.msra.mxu0 0.0
        %1337 = vmatprep.subr.mxu0 0.0
        %1338 = vmatpush1.msra.mxu0 0.0
        %1339 = vmatprep.subr.mxu0 0.0
        %1340 = vmatpush1.msra.mxu0 0.0
        %1341 = vmatprep.subr.mxu0 0.0
        %1342 = vmatpush1.msra.mxu0 0.0
        %1343 = vmatprep.subr.mxu0 0.0
        %1344 = vmatpush1.msra.mxu0 0.0
        %1345 = vmatprep.subr.mxu0 0.0
        %1346 = vmatpush1.msra.mxu0 0.0
        %1347 = vmatprep.subr.mxu0 0.0
        %1348 = vmatpush1.msra.mxu0 0.0
        %1349 = vmatprep.subr.mxu0 0.0
        %1350 = vmatpush1.msra.mxu0 0.0
        %1351 = vmatprep.subr.mxu0 0.0
        %1352 = vmatpush1.msra.mxu0 0.0
        %1353 = vmatprep.subr.mxu0 0.0
        %1354 = vmatpush1.msra.mxu0 0.0
        %1355 = vmatprep.subr.mxu0 0.0
        %1356 = vmatpush1.msra.mxu0 0.0
        %1357 = vmatprep.subr.mxu0 0.0
        %1358 = vmatpush1.msra.mxu0 0.0
        %1359 = vmatprep.subr.mxu0 0.0
        %1360 = vmatpush1.msra.mxu0 0.0
        %1361 = vmatprep.subr.mxu0 0.0
        %1362 = vmatpush1.msra.mxu0 0.0
        %1363 = vmatprep.subr.mxu0 0.0
        %1364 = vmatpush1.msra.mxu0 0.0
        %1365 = vmatprep.subr.mxu0 0.0
        %1366 = vmatpush1.msra.mxu0 0.0
        %1367 = vmatprep.subr.mxu0 0.0
        %1368 = vmatpush1.msra.mxu0 0.0
        %1369 = vmatprep.subr.mxu0 0.0
        %1370 = vmatpush1.msra.mxu0 0.0
        %1371 = vmatprep.subr.mxu0 0.0
        %1372 = vmatpush1.msra.mxu0 0.0
        %1373 = vmatprep.subr.mxu0 0.0
        %1374 = vmatpush1.msra.mxu0 0.0
        %1375 = vmatprep.subr.mxu0 0.0
        %1376 = vmatpush1.msra.mxu0 0.0
        %1377 = vmatprep.subr.mxu0 0.0
        %1378 = vmatpush1.msra.mxu0 0.0
        %1379 = vmatprep.subr.mxu0 0.0
        %1380 = vmatpush1.msra.mxu0 0.0
        %1381 = vmatprep.subr.mxu0 0.0
        %1382 = vmatpush1.msra.mxu0 0.0
        %1383 = vmatprep.subr.mxu0 0.0
        %1384 = vmatpush1.msra.mxu0 0.0
        %1385 = vmatprep.subr.mxu0 0.0
        %1386 = vmatpush1.msra.mxu0 0.0
        %1387 = vmatprep.subr.mxu0 0.0
        %1388 = vmatpush1.msra.mxu0 0.0
        %1389 = vmatprep.mubr.f32.mxu0 0.0
        %1390 = vmatmul.mubr.f32.gmra.mrb[0].mxu0 %v1323
        %v1391 = vpop.f32.mrb[0].mxu0
        %v1392 = vadd.f32 0.0, %v1391
        %v1393 = vpop.f32.mrb[0].mxu0
        %1394 = vdwg.mxu0
        %1395 = vrot.lane.b32.xlu0 %v1058, 120
        %v1396 = vpop.permute.xlu0 %1395
        %1397 = vrot.lane.b32.xlu0 %v1142, 120
        %v1398 = vpop.permute.xlu0 %1397
        %v1399 = vsel %vm1233, %v1396, 0
        %v1401 = vsel %vm1233, %v1398, 0
        %1403 = vmatprep.subr.mxu0 0.0
        %1404 = vmatpush1.xpose.msra.mxu0 %v1401
        %1405 = vmatprep.subr.mxu0 0.0
        %1406 = vmatpush1.xpose.msra.mxu0 0.0
        %1407 = vmatprep.subr.mxu0 0.0
        %1408 = vmatpush1.xpose.msra.mxu0 0.0
        %1409 = vmatprep.subr.mxu0 0.0
        %1410 = vmatpush1.xpose.msra.mxu0 0.0
        %1411 = vmatprep.subr.mxu0 0.0
        %1412 = vmatpush1.xpose.msra.mxu0 0.0
        %1413 = vmatprep.subr.mxu0 0.0
        %1414 = vmatpush1.xpose.msra.mxu0 0.0
        %1415 = vmatprep.subr.mxu0 0.0
        %1416 = vmatpush1.xpose.msra.mxu0 0.0
        %1417 = vmatprep.subr.mxu0 0.0
        %1418 = vmatpush1.xpose.msra.mxu0 0.0
        %1419 = vmatprep.subr.mxu0 0.0
        %1420 = vmatpush1.xpose.msra.mxu0 0.0
        %1421 = vmatprep.subr.mxu0 0.0
        %1422 = vmatpush1.xpose.msra.mxu0 0.0
        %1423 = vmatprep.subr.mxu0 0.0
        %1424 = vmatpush1.xpose.msra.mxu0 0.0
        %1425 = vmatprep.subr.mxu0 0.0
        %1426 = vmatpush1.xpose.msra.mxu0 0.0
        %1427 = vmatprep.subr.mxu0 0.0
        %1428 = vmatpush1.xpose.msra.mxu0 0.0
        %1429 = vmatprep.subr.mxu0 0.0
        %1430 = vmatpush1.xpose.msra.mxu0 0.0
        %1431 = vmatprep.subr.mxu0 0.0
        %1432 = vmatpush1.xpose.msra.mxu0 0.0
        %1433 = vmatprep.subr.mxu0 0.0
        %1434 = vmatpush1.xpose.msra.mxu0 0.0
        %1435 = vmatprep.subr.mxu0 0.0
        %1436 = vmatpush1.xpose.msra.mxu0 0.0
        %1437 = vmatprep.subr.mxu0 0.0
        %1438 = vmatpush1.xpose.msra.mxu0 0.0
        %1439 = vmatprep.subr.mxu0 0.0
        %1440 = vmatpush1.xpose.msra.mxu0 0.0
        %1441 = vmatprep.subr.mxu0 0.0
        %1442 = vmatpush1.xpose.msra.mxu0 0.0
        %1443 = vmatprep.subr.mxu0 0.0
        %1444 = vmatpush1.xpose.msra.mxu0 0.0
        %1445 = vmatprep.subr.mxu0 0.0
        %1446 = vmatpush1.xpose.msra.mxu0 0.0
        %1447 = vmatprep.subr.mxu0 0.0
        %1448 = vmatpush1.xpose.msra.mxu0 0.0
        %1449 = vmatprep.subr.mxu0 0.0
        %1450 = vmatpush1.xpose.msra.mxu0 0.0
        %1451 = vmatprep.subr.mxu0 0.0
        %1452 = vmatpush1.xpose.msra.mxu0 0.0
        %1453 = vmatprep.subr.mxu0 0.0
        %1454 = vmatpush1.xpose.msra.mxu0 0.0
        %1455 = vmatprep.subr.mxu0 0.0
        %1456 = vmatpush1.xpose.msra.mxu0 0.0
        %1457 = vmatprep.subr.mxu0 0.0
        %1458 = vmatpush1.xpose.msra.mxu0 0.0
        %1459 = vmatprep.subr.mxu0 0.0
        %1460 = vmatpush1.xpose.msra.mxu0 0.0
        %1461 = vmatprep.subr.mxu0 0.0
        %1462 = vmatpush1.xpose.msra.mxu0 0.0
        %1463 = vmatprep.subr.mxu0 0.0
        %1464 = vmatpush1.xpose.msra.mxu0 0.0
        %1465 = vmatprep.subr.mxu0 0.0
        %1466 = vmatpush1.xpose.msra.mxu0 0.0
        %1467 = vmatprep.mubr.f32.mxu0 0.0
        %1468 = vmatmul.mubr.f32.gmra.mrb[0].mxu0 %v1399
        %v1469 = vpop.f32.mrb[0].mxu0
        %v1470 = vadd.f32 0.0, %v1469
        %v1471 = vpop.f32.mrb[0].mxu0
        %1472 = vdwg.mxu0
        %v1473 = vmul.f32 %v1470, 0.35355338
        %v1474 = vsel %vm1233, %v1473, -inf
        %1475 = vmax.xlane.f32.xlu0 %v1474
        %v1476 = vpop.xlane.xlu0 %1475
        %v1477 = vsub.f32 %v1473, %v1476
        %v1478 = vmul.f32 %v1477, 1.442695
        %v1479 = vpow.pop %v1478
        %v1480 = vsel %vm1233, %v1479, 0.0
        %1481 = vadd.xlane.f32.xlu0 %v1480
        %v1482 = vpop.xlane.xlu0 %1481
        %v1483 = vrcp.pop %v1482
        %v1484 = vmul.f32 %v1479, %v1483
        %1486 = vrot.lane.b32.xlu0 %v1226, 120
        %v1487 = vpop.permute.xlu0 %1486
        %v1490 = vsel %vm1233, %v1484, 0
        %1492 = vmatprep.subr.mxu0 0.0
        %1493 = vmatpush1.msra.mxu0 %v1487
        %1494 = vmatprep.subr.mxu0 0.0
        %1495 = vmatpush1.msra.mxu0 0.0
        %1496 = vmatprep.subr.mxu0 0.0
        %1497 = vmatpush1.msra.mxu0 0.0
        %1498 = vmatprep.subr.mxu0 0.0
        %1499 = vmatpush1.msra.mxu0 0.0
        %1500 = vmatprep.subr.mxu0 0.0
        %1501 = vmatpush1.msra.mxu0 0.0
        %1502 = vmatprep.subr.mxu0 0.0
        %1503 = vmatpush1.msra.mxu0 0.0
        %1504 = vmatprep.subr.mxu0 0.0
        %1505 = vmatpush1.msra.mxu0 0.0
        %1506 = vmatprep.subr.mxu0 0.0
        %1507 = vmatpush1.msra.mxu0 0.0
        %1508 = vmatprep.subr.mxu0 0.0
        %1509 = vmatpush1.msra.mxu0 0.0
        %1510 = vmatprep.subr.mxu0 0.0
        %1511 = vmatpush1.msra.mxu0 0.0
        %1512 = vmatprep.subr.mxu0 0.0
        %1513 = vmatpush1.msra.mxu0 0.0
        %1514 = vmatprep.subr.mxu0 0.0
        %1515 = vmatpush1.msra.mxu0 0.0
        %1516 = vmatprep.subr.mxu0 0.0
        %1517 = vmatpush1.msra.mxu0 0.0
        %1518 = vmatprep.subr.mxu0 0.0
        %1519 = vmatpush1.msra.mxu0 0.0
        %1520 = vmatprep.subr.mxu0 0.0
        %1521 = vmatpush1.msra.mxu0 0.0
        %1522 = vmatprep.subr.mxu0 0.0
        %1523 = vmatpush1.msra.mxu0 0.0
        %1524 = vmatprep.subr.mxu0 0.0
        %1525 = vmatpush1.msra.mxu0 0.0
        %1526 = vmatprep.subr.mxu0 0.0
        %1527 = vmatpush1.msra.mxu0 0.0
        %1528 = vmatprep.subr.mxu0 0.0
        %1529 = vmatpush1.msra.mxu0 0.0
        %1530 = vmatprep.subr.mxu0 0.0
        %1531 = vmatpush1.msra.mxu0 0.0
        %1532 = vmatprep.subr.mxu0 0.0
        %1533 = vmatpush1.msra.mxu0 0.0
        %1534 = vmatprep.subr.mxu0 0.0
        %1535 = vmatpush1.msra.mxu0 0.0
        %1536 = vmatprep.subr.mxu0 0.0
        %1537 = vmatpush1.msra.mxu0 0.0
        %1538 = vmatprep.subr.mxu0 0.0
        %1539 = vmatpush1.msra.mxu0 0.0
        %1540 = vmatprep.subr.mxu0 0.0
        %1541 = vmatpush1.msra.mxu0 0.0
        %1542 = vmatprep.subr.mxu0 0.0
        %1543 = vmatpush1.msra.mxu0 0.0
        %1544 = vmatprep.subr.mxu0 0.0
        %1545 = vmatpush1.msra.mxu0 0.0
        %1546 = vmatprep.subr.mxu0 0.0
        %1547 = vmatpush1.msra.mxu0 0.0
        %1548 = vmatprep.subr.mxu0 0.0
        %1549 = vmatpush1.msra.mxu0 0.0
        %1550 = vmatprep.subr.mxu0 0.0
        %1551 = vmatpush1.msra.mxu0 0.0
        %1552 = vmatprep.subr.mxu0 0.0
        %1553 = vmatpush1.msra.mxu0 0.0
        %1554 = vmatprep.subr.mxu0 0.0
        %1555 = vmatpush1.msra.mxu0 0.0
        %1556 = vmatprep.mubr.f32.mxu0 0.0
        %1557 = vmatmul.mubr.f32.gmra.mrb[0].mxu0 %v1490
        %v1558 = vpop.f32.mrb[0].mxu0
        %v1559 = vadd.f32 0.0, %v1558
        %v1560 = vpop.f32.mrb[0].mxu0
        %1561 = vdwg.mxu0
        %v1563 = vsel %vm1233, %v1559, 0
        %1565 = vmatprep.subr.mxu0 0.0
        %1566 = vmatpush1.msra.mxu0 %v1230
        %1567 = vmatprep.subr.mxu0 0.0
        %1568 = vmatpush1.msra.mxu0 0.0
        %1569 = vmatprep.subr.mxu0 0.0
        %1570 = vmatpush1.msra.mxu0 0.0
        %1571 = vmatprep.subr.mxu0 0.0
        %1572 = vmatpush1.msra.mxu0 0.0
        %1573 = vmatprep.subr.mxu0 0.0
        %1574 = vmatpush1.msra.mxu0 0.0
        %1575 = vmatprep.subr.mxu0 0.0
        %1576 = vmatpush1.msra.mxu0 0.0
        %1577 = vmatprep.subr.mxu0 0.0
        %1578 = vmatpush1.msra.mxu0 0.0
        %1579 = vmatprep.subr.mxu0 0.0
        %1580 = vmatpush1.msra.mxu0 0.0
        %1581 = vmatprep.subr.mxu0 0.0
        %1582 = vmatpush1.msra.mxu0 0.0
        %1583 = vmatprep.subr.mxu0 0.0
        %1584 = vmatpush1.msra.mxu0 0.0
        %1585 = vmatprep.subr.mxu0 0.0
        %1586 = vmatpush1.msra.mxu0 0.0
        %1587 = vmatprep.subr.mxu0 0.0
        %1588 = vmatpush1.msra.mxu0 0.0
        %1589 = vmatprep.subr.mxu0 0.0
        %1590 = vmatpush1.msra.mxu0 0.0
        %1591 = vmatprep.subr.mxu0 0.0
        %1592 = vmatpush1.msra.mxu0 0.0
        %1593 = vmatprep.subr.mxu0 0.0
        %1594 = vmatpush1.msra.mxu0 0.0
        %1595 = vmatprep.subr.mxu0 0.0
        %1596 = vmatpush1.msra.mxu0 0.0
        %1597 = vmatprep.subr.mxu0 0.0
        %1598 = vmatpush1.msra.mxu0 0.0
        %1599 = vmatprep.subr.mxu0 0.0
        %1600 = vmatpush1.msra.mxu0 0.0
        %1601 = vmatprep.subr.mxu0 0.0
        %1602 = vmatpush1.msra.mxu0 0.0
        %1603 = vmatprep.subr.mxu0 0.0
        %1604 = vmatpush1.msra.mxu0 0.0
        %1605 = vmatprep.subr.mxu0 0.0
        %1606 = vmatpush1.msra.mxu0 0.0
        %1607 = vmatprep.subr.mxu0 0.0
        %1608 = vmatpush1.msra.mxu0 0.0
        %1609 = vmatprep.subr.mxu0 0.0
        %1610 = vmatpush1.msra.mxu0 0.0
        %1611 = vmatprep.subr.mxu0 0.0
        %1612 = vmatpush1.msra.mxu0 0.0
        %1613 = vmatprep.subr.mxu0 0.0
        %1614 = vmatpush1.msra.mxu0 0.0
        %1615 = vmatprep.subr.mxu0 0.0
        %1616 = vmatpush1.msra.mxu0 0.0
        %1617 = vmatprep.subr.mxu0 0.0
        %1618 = vmatpush1.msra.mxu0 0.0
        %1619 = vmatprep.subr.mxu0 0.0
        %1620 = vmatpush1.msra.mxu0 0.0
        %1621 = vmatprep.subr.mxu0 0.0
        %1622 = vmatpush1.msra.mxu0 0.0
        %1623 = vmatprep.subr.mxu0 0.0
        %1624 = vmatpush1.msra.mxu0 0.0
        %1625 = vmatprep.subr.mxu0 0.0
        %1626 = vmatpush1.msra.mxu0 0.0
        %1627 = vmatprep.subr.mxu0 0.0
        %1628 = vmatpush1.msra.mxu0 0.0
        %1629 = vmatprep.mubr.f32.mxu0 0.0
        %1630 = vmatmul.mubr.f32.gmra.mrb[0].mxu0 %v1563
        %v1631 = vpop.f32.mrb[0].mxu0
        %v1632 = vadd.f32 0.0, %v1631
        %v1633 = vpop.f32.mrb[0].mxu0
        %1634 = vdwg.mxu0
        %v1636 = vsel %vm1233, %v1392, 0
        %1638 = vmatprep.subr.mxu0 0.0
        %1639 = vmatpush1.msra.mxu0 %v1229
        %1640 = vmatprep.subr.mxu0 0.0
        %1641 = vmatpush1.msra.mxu0 0.0
        %1642 = vmatprep.subr.mxu0 0.0
        %1643 = vmatpush1.msra.mxu0 0.0
        %1644 = vmatprep.subr.mxu0 0.0
        %1645 = vmatpush1.msra.mxu0 0.0
        %1646 = vmatprep.subr.mxu0 0.0
        %1647 = vmatpush1.msra.mxu0 0.0
        %1648 = vmatprep.subr.mxu0 0.0
        %1649 = vmatpush1.msra.mxu0 0.0
        %1650 = vmatprep.subr.mxu0 0.0
        %1651 = vmatpush1.msra.mxu0 0.0
        %1652 = vmatprep.subr.mxu0 0.0
        %1653 = vmatpush1.msra.mxu0 0.0
        %1654 = vmatprep.subr.mxu0 0.0
        %1655 = vmatpush1.msra.mxu0 0.0
        %1656 = vmatprep.subr.mxu0 0.0
        %1657 = vmatpush1.msra.mxu0 0.0
        %1658 = vmatprep.subr.mxu0 0.0
        %1659 = vmatpush1.msra.mxu0 0.0
        %1660 = vmatprep.subr.mxu0 0.0
        %1661 = vmatpush1.msra.mxu0 0.0
        %1662 = vmatprep.subr.mxu0 0.0
        %1663 = vmatpush1.msra.mxu0 0.0
        %1664 = vmatprep.subr.mxu0 0.0
        %1665 = vmatpush1.msra.mxu0 0.0
        %1666 = vmatprep.subr.mxu0 0.0
        %1667 = vmatpush1.msra.mxu0 0.0
        %1668 = vmatprep.subr.mxu0 0.0
        %1669 = vmatpush1.msra.mxu0 0.0
        %1670 = vmatprep.subr.mxu0 0.0
        %1671 = vmatpush1.msra.mxu0 0.0
        %1672 = vmatprep.subr.mxu0 0.0
        %1673 = vmatpush1.msra.mxu0 0.0
        %1674 = vmatprep.subr.mxu0 0.0
        %1675 = vmatpush1.msra.mxu0 0.0
        %1676 = vmatprep.subr.mxu0 0.0
        %1677 = vmatpush1.msra.mxu0 0.0
        %1678 = vmatprep.subr.mxu0 0.0
        %1679 = vmatpush1.msra.mxu0 0.0
        %1680 = vmatprep.subr.mxu0 0.0
        %1681 = vmatpush1.msra.mxu0 0.0
        %1682 = vmatprep.subr.mxu0 0.0
        %1683 = vmatpush1.msra.mxu0 0.0
        %1684 = vmatprep.subr.mxu0 0.0
        %1685 = vmatpush1.msra.mxu0 0.0
        %1686 = vmatprep.subr.mxu0 0.0
        %1687 = vmatpush1.msra.mxu0 0.0
        %1688 = vmatprep.subr.mxu0 0.0
        %1689 = vmatpush1.msra.mxu0 0.0
        %1690 = vmatprep.subr.mxu0 0.0
        %1691 = vmatpush1.msra.mxu0 0.0
        %1692 = vmatprep.subr.mxu0 0.0
        %1693 = vmatpush1.msra.mxu0 0.0
        %1694 = vmatprep.subr.mxu0 0.0
        %1695 = vmatpush1.msra.mxu0 0.0
        %1696 = vmatprep.subr.mxu0 0.0
        %1697 = vmatpush1.msra.mxu0 0.0
        %1698 = vmatprep.subr.mxu0 0.0
        %1699 = vmatpush1.msra.mxu0 0.0
        %1700 = vmatprep.subr.mxu0 0.0
        %1701 = vmatpush1.msra.mxu0 0.0
        %1702 = vmatprep.mubr.f32.mxu0 0.0
        %1703 = vmatmul.mubr.f32.gmra.mrb[0].mxu0 %v1636
        %v1704 = vpop.f32.mrb[0].mxu0
        %v1705 = vadd.f32 %v1632, %v1704
        %v1706 = vpop.f32.mrb[0].mxu0
        %1707 = vdwg.mxu0
        %1708 = vrot.lane.b32.xlu0 %v1058, 112
        %v1709 = vpop.permute.xlu0 %1708
        %1710 = vrot.lane.b32.xlu0 %v1142, 112
        %v1711 = vpop.permute.xlu0 %1710
        %v1712 = vsel %vm1233, %v1709, 0
        %v1714 = vsel %vm1233, %v1711, 0
        %1716 = vmatprep.subr.mxu0 0.0
        %1717 = vmatpush1.xpose.msra.mxu0 %v1714
        %1718 = vmatprep.subr.mxu0 0.0
        %1719 = vmatpush1.xpose.msra.mxu0 0.0
        %1720 = vmatprep.subr.mxu0 0.0
        %1721 = vmatpush1.xpose.msra.mxu0 0.0
        %1722 = vmatprep.subr.mxu0 0.0
        %1723 = vmatpush1.xpose.msra.mxu0 0.0
        %1724 = vmatprep.subr.mxu0 0.0
        %1725 = vmatpush1.xpose.msra.mxu0 0.0
        %1726 = vmatprep.subr.mxu0 0.0
        %1727 = vmatpush1.xpose.msra.mxu0 0.0
        %1728 = vmatprep.subr.mxu0 0.0
        %1729 = vmatpush1.xpose.msra.mxu0 0.0
        %1730 = vmatprep.subr.mxu0 0.0
        %1731 = vmatpush1.xpose.msra.mxu0 0.0
        %1732 = vmatprep.subr.mxu0 0.0
        %1733 = vmatpush1.xpose.msra.mxu0 0.0
        %1734 = vmatprep.subr.mxu0 0.0
        %1735 = vmatpush1.xpose.msra.mxu0 0.0
        %1736 = vmatprep.subr.mxu0 0.0
        %1737 = vmatpush1.xpose.msra.mxu0 0.0
        %1738 = vmatprep.subr.mxu0 0.0
        %1739 = vmatpush1.xpose.msra.mxu0 0.0
        %1740 = vmatprep.subr.mxu0 0.0
        %1741 = vmatpush1.xpose.msra.mxu0 0.0
        %1742 = vmatprep.subr.mxu0 0.0
        %1743 = vmatpush1.xpose.msra.mxu0 0.0
        %1744 = vmatprep.subr.mxu0 0.0
        %1745 = vmatpush1.xpose.msra.mxu0 0.0
        %1746 = vmatprep.subr.mxu0 0.0
        %1747 = vmatpush1.xpose.msra.mxu0 0.0
        %1748 = vmatprep.subr.mxu0 0.0
        %1749 = vmatpush1.xpose.msra.mxu0 0.0
        %1750 = vmatprep.subr.mxu0 0.0
        %1751 = vmatpush1.xpose.msra.mxu0 0.0
        %1752 = vmatprep.subr.mxu0 0.0
        %1753 = vmatpush1.xpose.msra.mxu0 0.0
        %1754 = vmatprep.subr.mxu0 0.0
        %1755 = vmatpush1.xpose.msra.mxu0 0.0
        %1756 = vmatprep.subr.mxu0 0.0
        %1757 = vmatpush1.xpose.msra.mxu0 0.0
        %1758 = vmatprep.subr.mxu0 0.0
        %1759 = vmatpush1.xpose.msra.mxu0 0.0
        %1760 = vmatprep.subr.mxu0 0.0
        %1761 = vmatpush1.xpose.msra.mxu0 0.0
        %1762 = vmatprep.subr.mxu0 0.0
        %1763 = vmatpush1.xpose.msra.mxu0 0.0
        %1764 = vmatprep.subr.mxu0 0.0
        %1765 = vmatpush1.xpose.msra.mxu0 0.0
        %1766 = vmatprep.subr.mxu0 0.0
        %1767 = vmatpush1.xpose.msra.mxu0 0.0
        %1768 = vmatprep.subr.mxu0 0.0
        %1769 = vmatpush1.xpose.msra.mxu0 0.0
        %1770 = vmatprep.subr.mxu0 0.0
        %1771 = vmatpush1.xpose.msra.mxu0 0.0
        %1772 = vmatprep.subr.mxu0 0.0
        %1773 = vmatpush1.xpose.msra.mxu0 0.0
        %1774 = vmatprep.subr.mxu0 0.0
        %1775 = vmatpush1.xpose.msra.mxu0 0.0
        %1776 = vmatprep.subr.mxu0 0.0
        %1777 = vmatpush1.xpose.msra.mxu0 0.0
        %1778 = vmatprep.subr.mxu0 0.0
        %1779 = vmatpush1.xpose.msra.mxu0 0.0
        %1780 = vmatprep.mubr.f32.mxu0 0.0
        %1781 = vmatmul.mubr.f32.gmra.mrb[0].mxu0 %v1712
        %v1782 = vpop.f32.mrb[0].mxu0
        %v1783 = vadd.f32 0.0, %v1782
        %v1784 = vpop.f32.mrb[0].mxu0
        %1785 = vdwg.mxu0
        %v1786 = vmul.f32 %v1783, 0.35355338
        %v1787 = vsel %vm1233, %v1786, -inf
        %1788 = vmax.xlane.f32.xlu0 %v1787
        %v1789 = vpop.xlane.xlu0 %1788
        %v1790 = vsub.f32 %v1786, %v1789
        %v1791 = vmul.f32 %v1790, 1.442695
        %v1792 = vpow.pop %v1791
        %v1793 = vsel %vm1233, %v1792, 0.0
        %1794 = vadd.xlane.f32.xlu0 %v1793
        %v1795 = vpop.xlane.xlu0 %1794
        %v1796 = vrcp.pop %v1795
        %v1797 = vmul.f32 %v1792, %v1796
        %1798 = vrot.lane.b32.xlu0 %v1226, 112
        %v1799 = vpop.permute.xlu0 %1798
        %v1802 = vsel %vm1233, %v1797, 0
        %1804 = vmatprep.subr.mxu0 0.0
        %1805 = vmatpush1.msra.mxu0 %v1799
        %1806 = vmatprep.subr.mxu0 0.0
        %1807 = vmatpush1.msra.mxu0 0.0
        %1808 = vmatprep.subr.mxu0 0.0
        %1809 = vmatpush1.msra.mxu0 0.0
        %1810 = vmatprep.subr.mxu0 0.0
        %1811 = vmatpush1.msra.mxu0 0.0
        %1812 = vmatprep.subr.mxu0 0.0
        %1813 = vmatpush1.msra.mxu0 0.0
        %1814 = vmatprep.subr.mxu0 0.0
        %1815 = vmatpush1.msra.mxu0 0.0
        %1816 = vmatprep.subr.mxu0 0.0
        %1817 = vmatpush1.msra.mxu0 0.0
        %1818 = vmatprep.subr.mxu0 0.0
        %1819 = vmatpush1.msra.mxu0 0.0
        %1820 = vmatprep.subr.mxu0 0.0
        %1821 = vmatpush1.msra.mxu0 0.0
        %1822 = vmatprep.subr.mxu0 0.0
        %1823 = vmatpush1.msra.mxu0 0.0
        %1824 = vmatprep.subr.mxu0 0.0
        %1825 = vmatpush1.msra.mxu0 0.0
        %1826 = vmatprep.subr.mxu0 0.0
        %1827 = vmatpush1.msra.mxu0 0.0
        %1828 = vmatprep.subr.mxu0 0.0
        %1829 = vmatpush1.msra.mxu0 0.0
        %1830 = vmatprep.subr.mxu0 0.0
        %1831 = vmatpush1.msra.mxu0 0.0
        %1832 = vmatprep.subr.mxu0 0.0
        %1833 = vmatpush1.msra.mxu0 0.0
        %1834 = vmatprep.subr.mxu0 0.0
        %1835 = vmatpush1.msra.mxu0 0.0
        %1836 = vmatprep.subr.mxu0 0.0
        %1837 = vmatpush1.msra.mxu0 0.0
        %1838 = vmatprep.subr.mxu0 0.0
        %1839 = vmatpush1.msra.mxu0 0.0
        %1840 = vmatprep.subr.mxu0 0.0
        %1841 = vmatpush1.msra.mxu0 0.0
        %1842 = vmatprep.subr.mxu0 0.0
        %1843 = vmatpush1.msra.mxu0 0.0
        %1844 = vmatprep.subr.mxu0 0.0
        %1845 = vmatpush1.msra.mxu0 0.0
        %1846 = vmatprep.subr.mxu0 0.0
        %1847 = vmatpush1.msra.mxu0 0.0
        %1848 = vmatprep.subr.mxu0 0.0
        %1849 = vmatpush1.msra.mxu0 0.0
        %1850 = vmatprep.subr.mxu0 0.0
        %1851 = vmatpush1.msra.mxu0 0.0
        %1852 = vmatprep.subr.mxu0 0.0
        %1853 = vmatpush1.msra.mxu0 0.0
        %1854 = vmatprep.subr.mxu0 0.0
        %1855 = vmatpush1.msra.mxu0 0.0
        %1856 = vmatprep.subr.mxu0 0.0
        %1857 = vmatpush1.msra.mxu0 0.0
        %1858 = vmatprep.subr.mxu0 0.0
        %1859 = vmatpush1.msra.mxu0 0.0
        %1860 = vmatprep.subr.mxu0 0.0
        %1861 = vmatpush1.msra.mxu0 0.0
        %1862 = vmatprep.subr.mxu0 0.0
        %1863 = vmatpush1.msra.mxu0 0.0
        %1864 = vmatprep.subr.mxu0 0.0
        %1865 = vmatpush1.msra.mxu0 0.0
        %1866 = vmatprep.subr.mxu0 0.0
        %1867 = vmatpush1.msra.mxu0 0.0
        %1868 = vmatprep.mubr.f32.mxu0 0.0
        %1869 = vmatmul.mubr.f32.gmra.mrb[0].mxu0 %v1802
        %v1870 = vpop.f32.mrb[0].mxu0
        %v1871 = vadd.f32 0.0, %v1870
        %v1872 = vpop.f32.mrb[0].mxu0
        %1873 = vdwg.mxu0
        %v1875 = vsel %vm1233, %v1871, 0
        %1877 = vmatprep.subr.mxu0 0.0
        %1878 = vmatpush1.msra.mxu0 %v1231
        %1879 = vmatprep.subr.mxu0 0.0
        %1880 = vmatpush1.msra.mxu0 0.0
        %1881 = vmatprep.subr.mxu0 0.0
        %1882 = vmatpush1.msra.mxu0 0.0
        %1883 = vmatprep.subr.mxu0 0.0
        %1884 = vmatpush1.msra.mxu0 0.0
        %1885 = vmatprep.subr.mxu0 0.0
        %1886 = vmatpush1.msra.mxu0 0.0
        %1887 = vmatprep.subr.mxu0 0.0
        %1888 = vmatpush1.msra.mxu0 0.0
        %1889 = vmatprep.subr.mxu0 0.0
        %1890 = vmatpush1.msra.mxu0 0.0
        %1891 = vmatprep.subr.mxu0 0.0
        %1892 = vmatpush1.msra.mxu0 0.0
        %1893 = vmatprep.subr.mxu0 0.0
        %1894 = vmatpush1.msra.mxu0 0.0
        %1895 = vmatprep.subr.mxu0 0.0
        %1896 = vmatpush1.msra.mxu0 0.0
        %1897 = vmatprep.subr.mxu0 0.0
        %1898 = vmatpush1.msra.mxu0 0.0
        %1899 = vmatprep.subr.mxu0 0.0
        %1900 = vmatpush1.msra.mxu0 0.0
        %1901 = vmatprep.subr.mxu0 0.0
        %1902 = vmatpush1.msra.mxu0 0.0
        %1903 = vmatprep.subr.mxu0 0.0
        %1904 = vmatpush1.msra.mxu0 0.0
        %1905 = vmatprep.subr.mxu0 0.0
        %1906 = vmatpush1.msra.mxu0 0.0
        %1907 = vmatprep.subr.mxu0 0.0
        %1908 = vmatpush1.msra.mxu0 0.0
        %1909 = vmatprep.subr.mxu0 0.0
        %1910 = vmatpush1.msra.mxu0 0.0
        %1911 = vmatprep.subr.mxu0 0.0
        %1912 = vmatpush1.msra.mxu0 0.0
        %1913 = vmatprep.subr.mxu0 0.0
        %1914 = vmatpush1.msra.mxu0 0.0
        %1915 = vmatprep.subr.mxu0 0.0
        %1916 = vmatpush1.msra.mxu0 0.0
        %1917 = vmatprep.subr.mxu0 0.0
        %1918 = vmatpush1.msra.mxu0 0.0
        %1919 = vmatprep.subr.mxu0 0.0
        %1920 = vmatpush1.msra.mxu0 0.0
        %1921 = vmatprep.subr.mxu0 0.0
        %1922 = vmatpush1.msra.mxu0 0.0
        %1923 = vmatprep.subr.mxu0 0.0
        %1924 = vmatpush1.msra.mxu0 0.0
        %1925 = vmatprep.subr.mxu0 0.0
        %1926 = vmatpush1.msra.mxu0 0.0
        %1927 = vmatprep.subr.mxu0 0.0
        %1928 = vmatpush1.msra.mxu0 0.0
        %1929 = vmatprep.subr.mxu0 0.0
        %1930 = vmatpush1.msra.mxu0 0.0
        %1931 = vmatprep.subr.mxu0 0.0
        %1932 = vmatpush1.msra.mxu0 0.0
        %1933 = vmatprep.subr.mxu0 0.0
        %1934 = vmatpush1.msra.mxu0 0.0
        %1935 = vmatprep.subr.mxu0 0.0
        %1936 = vmatpush1.msra.mxu0 0.0
        %1937 = vmatprep.subr.mxu0 0.0
        %1938 = vmatpush1.msra.mxu0 0.0
        %1939 = vmatprep.subr.mxu0 0.0
        %1940 = vmatpush1.msra.mxu0 0.0
        %1941 = vmatprep.mubr.f32.mxu0 0.0
        %1942 = vmatmul.mubr.f32.gmra.mrb[0].mxu0 %v1875
        %v1943 = vpop.f32.mrb[0].mxu0
        %v1944 = vadd.f32 0.0, %v1943
        %v1945 = vpop.f32.mrb[0].mxu0
        %1946 = vdwg.mxu0
        %v1947 = vadd.f32 %v1705, %v1944
        %1948 = vrot.lane.b32.xlu0 %v1058, 104
        %v1949 = vpop.permute.xlu0 %1948
        %1950 = vrot.lane.b32.xlu0 %v1142, 104
        %v1951 = vpop.permute.xlu0 %1950
        %v1952 = vsel %vm1233, %v1949, 0
        %v1954 = vsel %vm1233, %v1951, 0
        %1956 = vmatprep.subr.mxu0 0.0
        %1957 = vmatpush1.xpose.msra.mxu0 %v1954
        %1958 = vmatprep.subr.mxu0 0.0
        %1959 = vmatpush1.xpose.msra.mxu0 0.0
        %1960 = vmatprep.subr.mxu0 0.0
        %1961 = vmatpush1.xpose.msra.mxu0 0.0
        %1962 = vmatprep.subr.mxu0 0.0
        %1963 = vmatpush1.xpose.msra.mxu0 0.0
        %1964 = vmatprep.subr.mxu0 0.0
        %1965 = vmatpush1.xpose.msra.mxu0 0.0
        %1966 = vmatprep.subr.mxu0 0.0
        %1967 = vmatpush1.xpose.msra.mxu0 0.0
        %1968 = vmatprep.subr.mxu0 0.0
        %1969 = vmatpush1.xpose.msra.mxu0 0.0
        %1970 = vmatprep.subr.mxu0 0.0
        %1971 = vmatpush1.xpose.msra.mxu0 0.0
        %1972 = vmatprep.subr.mxu0 0.0
        %1973 = vmatpush1.xpose.msra.mxu0 0.0
        %1974 = vmatprep.subr.mxu0 0.0
        %1975 = vmatpush1.xpose.msra.mxu0 0.0
        %1976 = vmatprep.subr.mxu0 0.0
        %1977 = vmatpush1.xpose.msra.mxu0 0.0
        %1978 = vmatprep.subr.mxu0 0.0
        %1979 = vmatpush1.xpose.msra.mxu0 0.0
        %1980 = vmatprep.subr.mxu0 0.0
        %1981 = vmatpush1.xpose.msra.mxu0 0.0
        %1982 = vmatprep.subr.mxu0 0.0
        %1983 = vmatpush1.xpose.msra.mxu0 0.0
        %1984 = vmatprep.subr.mxu0 0.0
        %1985 = vmatpush1.xpose.msra.mxu0 0.0
        %1986 = vmatprep.subr.mxu0 0.0
        %1987 = vmatpush1.xpose.msra.mxu0 0.0
        %1988 = vmatprep.subr.mxu0 0.0
        %1989 = vmatpush1.xpose.msra.mxu0 0.0
        %1990 = vmatprep.subr.mxu0 0.0
        %1991 = vmatpush1.xpose.msra.mxu0 0.0
        %1992 = vmatprep.subr.mxu0 0.0
        %1993 = vmatpush1.xpose.msra.mxu0 0.0
        %1994 = vmatprep.subr.mxu0 0.0
        %1995 = vmatpush1.xpose.msra.mxu0 0.0
        %1996 = vmatprep.subr.mxu0 0.0
        %1997 = vmatpush1.xpose.msra.mxu0 0.0
        %1998 = vmatprep.subr.mxu0 0.0
        %1999 = vmatpush1.xpose.msra.mxu0 0.0
        %2000 = vmatprep.subr.mxu0 0.0
        %2001 = vmatpush1.xpose.msra.mxu0 0.0
        %2002 = vmatprep.subr.mxu0 0.0
        %2003 = vmatpush1.xpose.msra.mxu0 0.0
        %2004 = vmatprep.subr.mxu0 0.0
        %2005 = vmatpush1.xpose.msra.mxu0 0.0
        %2006 = vmatprep.subr.mxu0 0.0
        %2007 = vmatpush1.xpose.msra.mxu0 0.0
        %2008 = vmatprep.subr.mxu0 0.0
        %2009 = vmatpush1.xpose.msra.mxu0 0.0
        %2010 = vmatprep.subr.mxu0 0.0
        %2011 = vmatpush1.xpose.msra.mxu0 0.0
        %2012 = vmatprep.subr.mxu0 0.0
        %2013 = vmatpush1.xpose.msra.mxu0 0.0
        %2014 = vmatprep.subr.mxu0 0.0
        %2015 = vmatpush1.xpose.msra.mxu0 0.0
        %2016 = vmatprep.subr.mxu0 0.0
        %2017 = vmatpush1.xpose.msra.mxu0 0.0
        %2018 = vmatprep.subr.mxu0 0.0
        %2019 = vmatpush1.xpose.msra.mxu0 0.0
        %2020 = vmatprep.mubr.f32.mxu0 0.0
        %2021 = vmatmul.mubr.f32.gmra.mrb[0].mxu0 %v1952
        %v2022 = vpop.f32.mrb[0].mxu0
        %v2023 = vadd.f32 0.0, %v2022
        %v2024 = vpop.f32.mrb[0].mxu0
        %2025 = vdwg.mxu0
        %v2026 = vmul.f32 %v2023, 0.35355338
        %v2027 = vsel %vm1233, %v2026, -inf
        %2028 = vmax.xlane.f32.xlu0 %v2027
        %v2029 = vpop.xlane.xlu0 %2028
        %v2030 = vsub.f32 %v2026, %v2029
        %v2031 = vmul.f32 %v2030, 1.442695
        %v2032 = vpow.pop %v2031
        %v2033 = vsel %vm1233, %v2032, 0.0
        %2034 = vadd.xlane.f32.xlu0 %v2033
        %v2035 = vpop.xlane.xlu0 %2034
        %v2036 = vrcp.pop %v2035
        %v2037 = vmul.f32 %v2032, %v2036
        %2038 = vrot.lane.b32.xlu0 %v1226, 104
        %v2039 = vpop.permute.xlu0 %2038
        %v2042 = vsel %vm1233, %v2037, 0
        %2044 = vmatprep.subr.mxu0 0.0
        %2045 = vmatpush1.msra.mxu0 %v2039
        %2046 = vmatprep.subr.mxu0 0.0
        %2047 = vmatpush1.msra.mxu0 0.0
        %2048 = vmatprep.subr.mxu0 0.0
        %2049 = vmatpush1.msra.mxu0 0.0
        %2050 = vmatprep.subr.mxu0 0.0
        %2051 = vmatpush1.msra.mxu0 0.0
        %2052 = vmatprep.subr.mxu0 0.0
        %2053 = vmatpush1.msra.mxu0 0.0
        %2054 = vmatprep.subr.mxu0 0.0
        %2055 = vmatpush1.msra.mxu0 0.0
        %2056 = vmatprep.subr.mxu0 0.0
        %2057 = vmatpush1.msra.mxu0 0.0
        %2058 = vmatprep.subr.mxu0 0.0
        %2059 = vmatpush1.msra.mxu0 0.0
        %2060 = vmatprep.subr.mxu0 0.0
        %2061 = vmatpush1.msra.mxu0 0.0
        %2062 = vmatprep.subr.mxu0 0.0
        %2063 = vmatpush1.msra.mxu0 0.0
        %2064 = vmatprep.subr.mxu0 0.0
        %2065 = vmatpush1.msra.mxu0 0.0
        %2066 = vmatprep.subr.mxu0 0.0
        %2067 = vmatpush1.msra.mxu0 0.0
        %2068 = vmatprep.subr.mxu0 0.0
        %2069 = vmatpush1.msra.mxu0 0.0
        %2070 = vmatprep.subr.mxu0 0.0
        %2071 = vmatpush1.msra.mxu0 0.0
        %2072 = vmatprep.subr.mxu0 0.0
        %2073 = vmatpush1.msra.mxu0 0.0
        %2074 = vmatprep.subr.mxu0 0.0
        %2075 = vmatpush1.msra.mxu0 0.0
        %2076 = vmatprep.subr.mxu0 0.0
        %2077 = vmatpush1.msra.mxu0 0.0
        %2078 = vmatprep.subr.mxu0 0.0
        %2079 = vmatpush1.msra.mxu0 0.0
        %2080 = vmatprep.subr.mxu0 0.0
        %2081 = vmatpush1.msra.mxu0 0.0
        %2082 = vmatprep.subr.mxu0 0.0
        %2083 = vmatpush1.msra.mxu0 0.0
        %2084 = vmatprep.subr.mxu0 0.0
        %2085 = vmatpush1.msra.mxu0 0.0
        %2086 = vmatprep.subr.mxu0 0.0
        %2087 = vmatpush1.msra.mxu0 0.0
        %2088 = vmatprep.subr.mxu0 0.0
        %2089 = vmatpush1.msra.mxu0 0.0
        %2090 = vmatprep.subr.mxu0 0.0
        %2091 = vmatpush1.msra.mxu0 0.0
        %2092 = vmatprep.subr.mxu0 0.0
        %2093 = vmatpush1.msra.mxu0 0.0
        %2094 = vmatprep.subr.mxu0 0.0
        %2095 = vmatpush1.msra.mxu0 0.0
        %2096 = vmatprep.subr.mxu0 0.0
        %2097 = vmatpush1.msra.mxu0 0.0
        %2098 = vmatprep.subr.mxu0 0.0
        %2099 = vmatpush1.msra.mxu0 0.0
        %2100 = vmatprep.subr.mxu0 0.0
        %2101 = vmatpush1.msra.mxu0 0.0
        %2102 = vmatprep.subr.mxu0 0.0
        %2103 = vmatpush1.msra.mxu0 0.0
        %2104 = vmatprep.subr.mxu0 0.0
        %2105 = vmatpush1.msra.mxu0 0.0
        %2106 = vmatprep.subr.mxu0 0.0
        %2107 = vmatpush1.msra.mxu0 0.0
        %2108 = vmatprep.mubr.f32.mxu0 0.0
        %2109 = vmatmul.mubr.f32.gmra.mrb[0].mxu0 %v2042
        %v2110 = vpop.f32.mrb[0].mxu0
        %v2111 = vadd.f32 0.0, %v2110
        %v2112 = vpop.f32.mrb[0].mxu0
        %2113 = vdwg.mxu0
        %v2115 = vsel %vm1233, %v2111, 0
        %2117 = vmatprep.subr.mxu0 0.0
        %2118 = vmatpush1.msra.mxu0 %v1232
        %2119 = vmatprep.subr.mxu0 0.0
        %2120 = vmatpush1.msra.mxu0 0.0
        %2121 = vmatprep.subr.mxu0 0.0
        %2122 = vmatpush1.msra.mxu0 0.0
        %2123 = vmatprep.subr.mxu0 0.0
        %2124 = vmatpush1.msra.mxu0 0.0
        %2125 = vmatprep.subr.mxu0 0.0
        %2126 = vmatpush1.msra.mxu0 0.0
        %2127 = vmatprep.subr.mxu0 0.0
        %2128 = vmatpush1.msra.mxu0 0.0
        %2129 = vmatprep.subr.mxu0 0.0
        %2130 = vmatpush1.msra.mxu0 0.0
        %2131 = vmatprep.subr.mxu0 0.0
        %2132 = vmatpush1.msra.mxu0 0.0
        %2133 = vmatprep.subr.mxu0 0.0
        %2134 = vmatpush1.msra.mxu0 0.0
        %2135 = vmatprep.subr.mxu0 0.0
        %2136 = vmatpush1.msra.mxu0 0.0
        %2137 = vmatprep.subr.mxu0 0.0
        %2138 = vmatpush1.msra.mxu0 0.0
        %2139 = vmatprep.subr.mxu0 0.0
        %2140 = vmatpush1.msra.mxu0 0.0
        %2141 = vmatprep.subr.mxu0 0.0
        %2142 = vmatpush1.msra.mxu0 0.0
        %2143 = vmatprep.subr.mxu0 0.0
        %2144 = vmatpush1.msra.mxu0 0.0
        %2145 = vmatprep.subr.mxu0 0.0
        %2146 = vmatpush1.msra.mxu0 0.0
        %2147 = vmatprep.subr.mxu0 0.0
        %2148 = vmatpush1.msra.mxu0 0.0
        %2149 = vmatprep.subr.mxu0 0.0
        %2150 = vmatpush1.msra.mxu0 0.0
        %2151 = vmatprep.subr.mxu0 0.0
        %2152 = vmatpush1.msra.mxu0 0.0
        %2153 = vmatprep.subr.mxu0 0.0
        %2154 = vmatpush1.msra.mxu0 0.0
        %2155 = vmatprep.subr.mxu0 0.0
        %2156 = vmatpush1.msra.mxu0 0.0
        %2157 = vmatprep.subr.mxu0 0.0
        %2158 = vmatpush1.msra.mxu0 0.0
        %2159 = vmatprep.subr.mxu0 0.0
        %2160 = vmatpush1.msra.mxu0 0.0
        %2161 = vmatprep.subr.mxu0 0.0
        %2162 = vmatpush1.msra.mxu0 0.0
        %2163 = vmatprep.subr.mxu0 0.0
        %2164 = vmatpush1.msra.mxu0 0.0
        %2165 = vmatprep.subr.mxu0 0.0
        %2166 = vmatpush1.msra.mxu0 0.0
        %2167 = vmatprep.subr.mxu0 0.0
        %2168 = vmatpush1.msra.mxu0 0.0
        %2169 = vmatprep.subr.mxu0 0.0
        %2170 = vmatpush1.msra.mxu0 0.0
        %2171 = vmatprep.subr.mxu0 0.0
        %2172 = vmatpush1.msra.mxu0 0.0
        %2173 = vmatprep.subr.mxu0 0.0
        %2174 = vmatpush1.msra.mxu0 0.0
        %2175 = vmatprep.subr.mxu0 0.0
        %2176 = vmatpush1.msra.mxu0 0.0
        %2177 = vmatprep.subr.mxu0 0.0
        %2178 = vmatpush1.msra.mxu0 0.0
        %2179 = vmatprep.subr.mxu0 0.0
        %2180 = vmatpush1.msra.mxu0 0.0
        %2181 = vmatprep.mubr.f32.mxu0 0.0
        %2182 = vmatmul.mubr.f32.gmra.mrb[0].mxu0 %v2115
        %v2183 = vpop.f32.mrb[0].mxu0
        %v2184 = vadd.f32 0.0, %v2183
        %v2185 = vpop.f32.mrb[0].mxu0
        %2186 = vdwg.mxu0
        %v2187 = vadd.f32 %v1947, %v2184
        %v2188 = vld [vmem:[#allocation14] sm:$0x1]
        %v2190 = vlaneseq
        %v2191 = vshrl.u32 %v2190, 7
        %v2192 = vsub.s32 0, %v2191
        %v2193 = vrot.slane %v2188, %v2192
        %v2195 = vadd.f32 %v2187, %v2193
        %v2196 = vadd.f32 %v2195, %v720
        %v2197 = vld [vmem:[#allocation16] sm:$0x1]
        %v2198 = vld [vmem:[#allocation17] sm:$0x1]
        %v2199 = vsel %vm723, %v2196, 0.0
        %2200 = vadd.xlane.f32.xlu0 %v2199
        %v2201 = vpop.xlane.xlu0 %2200
        %v2202 = vmul.f32 %v2201, %v727
        %v2203 = vsub.f32 %v2196, %v2202
        %v2204 = vmul.f32 %v2203, %v2203
        %v2205 = vsel %vm723, %v2204, 0.0
        %2206 = vadd.xlane.f32.xlu0 %v2205
        %v2207 = vpop.xlane.xlu0 %2206
        %v2208 = vmul.f32 %v2207, %v727
        %v2209 = vadd.f32 %v2208, 1e-05
        %v2210 = vrsqrt.pop %v2209
        %v2211 = vmul.f32 %v2203, %v2210
        %v2213 = vlaneseq
        %v2214 = vshrl.u32 %v2213, 7
        %v2215 = vsub.s32 0, %v2214
        %v2216 = vrot.slane %v2197, %v2215
        %v2218 = vmul.f32 %v2211, %v2216
        %v2220 = vlaneseq
        %v2221 = vshrl.u32 %v2220, 7
        %v2222 = vsub.s32 0, %v2221
        %v2223 = vrot.slane %v2198, %v2222
        %v2225 = vadd.f32 %v2218, %v2223
        %v2226 = vld [vmem:[#allocation19] sm:$0xff]
        %v2227 = vld [vmem:[#allocation19 + $0x8] sm:$0xff]
        %v2228 = vld [vmem:[#allocation19 + $0x10] sm:$0xff]
        %v2229 = vld [vmem:[#allocation19 + $0x18] sm:$0xff]
        %v2231 = vsel %vm723, %v2225, 0
        %2233 = vmatprep.subr.mxu0 0.0
        %2234 = vmatpush1.msra.mxu0 %v2226
        %2235 = vmatprep.subr.mxu0 0.0
        %2236 = vmatpush1.msra.mxu0 %v2227
        %2237 = vmatprep.subr.mxu0 0.0
        %2238 = vmatpush1.msra.mxu0 %v2228
        %2239 = vmatprep.subr.mxu0 0.0
        %2240 = vmatpush1.msra.mxu0 %v2229
        %2241 = vmatprep.subr.mxu0 0.0
        %2242 = vmatpush1.msra.mxu0 0.0
        %2243 = vmatprep.subr.mxu0 0.0
        %2244 = vmatpush1.msra.mxu0 0.0
        %2245 = vmatprep.subr.mxu0 0.0
        %2246 = vmatpush1.msra.mxu0 0.0
        %2247 = vmatprep.subr.mxu0 0.0
        %2248 = vmatpush1.msra.mxu0 0.0
        %2249 = vmatprep.subr.mxu0 0.0
        %2250 = vmatpush1.msra.mxu0 0.0
        %2251 = vmatprep.subr.mxu0 0.0
        %2252 = vmatpush1.msra.mxu0 0.0
        %2253 = vmatprep.subr.mxu0 0.0
        %2254 = vmatpush1.msra.mxu0 0.0
        %2255 = vmatprep.subr.mxu0 0.0
        %2256 = vmatpush1.msra.mxu0 0.0
        %2257 = vmatprep.subr.mxu0 0.0
        %2258 = vmatpush1.msra.mxu0 0.0
        %2259 = vmatprep.subr.mxu0 0.0
        %2260 = vmatpush1.msra.mxu0 0.0
        %2261 = vmatprep.subr.mxu0 0.0
        %2262 = vmatpush1.msra.mxu0 0.0
        %2263 = vmatprep.subr.mxu0 0.0
        %2264 = vmatpush1.msra.mxu0 0.0
        %2265 = vmatprep.subr.mxu0 0.0
        %2266 = vmatpush1.msra.mxu0 0.0
        %2267 = vmatprep.subr.mxu0 0.0
        %2268 = vmatpush1.msra.mxu0 0.0
        %2269 = vmatprep.subr.mxu0 0.0
        %2270 = vmatpush1.msra.mxu0 0.0
        %2271 = vmatprep.subr.mxu0 0.0
        %2272 = vmatpush1.msra.mxu0 0.0
        %2273 = vmatprep.subr.mxu0 0.0
        %2274 = vmatpush1.msra.mxu0 0.0
        %2275 = vmatprep.subr.mxu0 0.0
        %2276 = vmatpush1.msra.mxu0 0.0
        %2277 = vmatprep.subr.mxu0 0.0
        %2278 = vmatpush1.msra.mxu0 0.0
        %2279 = vmatprep.subr.mxu0 0.0
        %2280 = vmatpush1.msra.mxu0 0.0
        %2281 = vmatprep.subr.mxu0 0.0
        %2282 = vmatpush1.msra.mxu0 0.0
        %2283 = vmatprep.subr.mxu0 0.0
        %2284 = vmatpush1.msra.mxu0 0.0
        %2285 = vmatprep.subr.mxu0 0.0
        %2286 = vmatpush1.msra.mxu0 0.0
        %2287 = vmatprep.subr.mxu0 0.0
        %2288 = vmatpush1.msra.mxu0 0.0
        %2289 = vmatprep.subr.mxu0 0.0
        %2290 = vmatpush1.msra.mxu0 0.0
        %2291 = vmatprep.subr.mxu0 0.0
        %2292 = vmatpush1.msra.mxu0 0.0
        %2293 = vmatprep.subr.mxu0 0.0
        %2294 = vmatpush1.msra.mxu0 0.0
        %2295 = vmatprep.subr.mxu0 0.0
        %2296 = vmatpush1.msra.mxu0 0.0
        %2297 = vmatprep.mubr.f32.mxu0 0.0
        %2298 = vmatmul.mubr.f32.gmra.mrb[0].mxu0 %v2231
        %v2299 = vpop.f32.mrb[0].mxu0
        %v2300 = vadd.f32 0.0, %v2299
        %v2301 = vpop.f32.mrb[0].mxu0
        %2302 = vdwg.mxu0
        %v2303 = vmax.f32 %v2300, 0.0
        %v2304 = vld [vmem:[%s17] sm:$0xff]
        %v2305 = vld [vmem:[%s17 + $0x8] sm:$0xff]
        %v2306 = vld [vmem:[%s17 + $0x10] sm:$0xff]
        %v2307 = vld [vmem:[%s17 + $0x18] sm:$0xff]
        %v2308 = vld [vmem:[%s17 + $0x20] sm:$0xff]
        %v2309 = vld [vmem:[%s17 + $0x28] sm:$0xff]
        %v2310 = vld [vmem:[%s17 + $0x30] sm:$0xff]
        %v2311 = vld [vmem:[%s17 + $0x38] sm:$0xff]
        %v2312 = vld [vmem:[%s17 + $0x40] sm:$0xff]
        %v2313 = vld [vmem:[%s17 + $0x48] sm:$0xff]
        %v2314 = vld [vmem:[%s17 + $0x50] sm:$0xff]
        %v2315 = vld [vmem:[%s17 + $0x58] sm:$0xff]
        %v2316 = vld [vmem:[%s17 + $0x60] sm:$0xff]
        %v2317 = vld [vmem:[%s17 + $0x68] sm:$0xff]
        %v2318 = vld [vmem:[%s17 + $0x70] sm:$0xff]
        %v2319 = vld [vmem:[%s17 + $0x78] sm:$0xff]
        %2320 = vmatprep.subr.mxu0 0.0
        %2321 = vmatpush1.msra.mxu0 %v2304
        %2322 = vmatprep.subr.mxu0 0.0
        %2323 = vmatpush1.msra.mxu0 %v2305
        %2324 = vmatprep.subr.mxu0 0.0
        %2325 = vmatpush1.msra.mxu0 %v2306
        %2326 = vmatprep.subr.mxu0 0.0
        %2327 = vmatpush1.msra.mxu0 %v2307
        %2328 = vmatprep.subr.mxu0 0.0
        %2329 = vmatpush1.msra.mxu0 %v2308
        %2330 = vmatprep.subr.mxu0 0.0
        %2331 = vmatpush1.msra.mxu0 %v2309
        %2332 = vmatprep.subr.mxu0 0.0
        %2333 = vmatpush1.msra.mxu0 %v2310
        %2334 = vmatprep.subr.mxu0 0.0
        %2335 = vmatpush1.msra.mxu0 %v2311
        %2336 = vmatprep.subr.mxu0 0.0
        %2337 = vmatpush1.msra.mxu0 %v2312
        %2338 = vmatprep.subr.mxu0 0.0
        %2339 = vmatpush1.msra.mxu0 %v2313
        %2340 = vmatprep.subr.mxu0 0.0
        %2341 = vmatpush1.msra.mxu0 %v2314
        %2342 = vmatprep.subr.mxu0 0.0
        %2343 = vmatpush1.msra.mxu0 %v2315
        %2344 = vmatprep.subr.mxu0 0.0
        %2345 = vmatpush1.msra.mxu0 %v2316
        %2346 = vmatprep.subr.mxu0 0.0
        %2347 = vmatpush1.msra.mxu0 %v2317
        %2348 = vmatprep.subr.mxu0 0.0
        %2349 = vmatpush1.msra.mxu0 %v2318
        %2350 = vmatprep.subr.mxu0 0.0
        %2351 = vmatpush1.msra.mxu0 %v2319
        %2352 = vmatprep.subr.mxu0 0.0
        %2353 = vmatpush1.msra.mxu0 0.0
        %2354 = vmatprep.subr.mxu0 0.0
        %2355 = vmatpush1.msra.mxu0 0.0
        %2356 = vmatprep.subr.mxu0 0.0
        %2357 = vmatpush1.msra.mxu0 0.0
        %2358 = vmatprep.subr.mxu0 0.0
        %2359 = vmatpush1.msra.mxu0 0.0
        %2360 = vmatprep.subr.mxu0 0.0
        %2361 = vmatpush1.msra.mxu0 0.0
        %2362 = vmatprep.subr.mxu0 0.0
        %2363 = vmatpush1.msra.mxu0 0.0
        %2364 = vmatprep.subr.mxu0 0.0
        %2365 = vmatpush1.msra.mxu0 0.0
        %2366 = vmatprep.subr.mxu0 0.0
        %2367 = vmatpush1.msra.mxu0 0.0
        %2368 = vmatprep.subr.mxu0 0.0
        %2369 = vmatpush1.msra.mxu0 0.0
        %2370 = vmatprep.subr.mxu0 0.0
        %2371 = vmatpush1.msra.mxu0 0.0
        %2372 = vmatprep.subr.mxu0 0.0
        %2373 = vmatpush1.msra.mxu0 0.0
        %2374 = vmatprep.subr.mxu0 0.0
        %2375 = vmatpush1.msra.mxu0 0.0
        %2376 = vmatprep.subr.mxu0 0.0
        %2377 = vmatpush1.msra.mxu0 0.0
        %2378 = vmatprep.subr.mxu0 0.0
        %2379 = vmatpush1.msra.mxu0 0.0
        %2380 = vmatprep.subr.mxu0 0.0
        %2381 = vmatpush1.msra.mxu0 0.0
        %2382 = vmatprep.subr.mxu0 0.0
        %2383 = vmatpush1.msra.mxu0 0.0
        %2384 = vmatprep.mubr.f32.mxu0 0.0
        %2385 = vmatmul.mubr.f32.gmra.mrb[0].mxu0 %v2303
        %v2386 = vpop.f32.mrb[0].mxu0
        %v2387 = vadd.f32 0.0, %v2386
        %v2388 = vpop.f32.mrb[0].mxu0
        %2389 = vdwg.mxu0
        %v2390 = vadd.f32 %v2196, %v2387
        %2391 = vst.msk [vmem:[%s719] sm:$0xff] %vm723, %v2390
        %s2392 = sand.u32 %s431, 1
        %s2393 = scalar_lea.sflag [#allocation4], %s2392
        %s2394 = sand.u32 %s431, 1
        %s2395 = smul.addr %s2394, 8
        %s2396 = scalar_lea.vmem [#allocation20], %s2395
        // Predicated region
        $region137: #{tpu_custom_call.1} parent=91 // pred_check
          %p2397 = pneg %p441
        $region138: #{tpu_custom_call.1} parent=91 // pred_check_branch
          %2399 = sbr.rel (%p2397) target = $region140
        $region139: #{tpu_custom_call.1} parent=91 // pred_region
          %s2401 = ssub.s32 128, 128
          %2402 = vsyncadd %s2393, %s2401
          %s2403 = smul.addr %s40, 128
          %s2404 = scalar_lea.hbm %s18, %s2403
          %s2406 = sshll.u32 %s2396, 4
          %s2407 = int_to_ptr.vmem [resolvable:$true] %s2406
          %2409 = dma.vmem_to_hbm [thread:$0]  %s2407, 128, %s2404, %s2393
        $region140: #{tpu_custom_call.1} parent=91 // pred_fallthru
          _
      $region92: #{tpu_custom_call.1} parent=5 // pred_fallthru
        _
      %p2410 = scmp.le.s32.totalorder 2, %s35
      // Predicated region
      $region141: #{tpu_custom_call.1} parent=5 // pred_check
        %p2411 = pneg %p2410
      $region142: #{tpu_custom_call.1} parent=5 // pred_check_branch
        %2413 = sbr.rel (%p2411) target = $region144
      $region143: #{tpu_custom_call.1} parent=5 // pred_region
        %s2414 = ssub.s32 %s35, 2
        // Predicated region
        $region145: #{tpu_custom_call.1} parent=143 // pred_check
          %p2415 = pneg %p447
        $region146: #{tpu_custom_call.1} parent=143 // pred_check_branch
          %2417 = sbr.rel (%p2415) target = $region148
        $region147: #{tpu_custom_call.1} parent=143 // pred_region
          %s2418 = sand.u32 %s432, 1
          %s2419 = scalar_lea.sflag [#allocation4], %s2418
          %s2420 = sand.u32 %s432, 1
          %s2421 = smul.addr %s2420, 8
          %s2422 = scalar_lea.vmem [#allocation20], %s2421
          %2423 = dma.done %s2419, 128
        $region148: #{tpu_custom_call.1} parent=143 // pred_fallthru
          _
      $region144: #{tpu_custom_call.1} parent=5 // pred_fallthru
        _
    $region6: #{tpu_custom_call.1} parent=1 // loop_footer
      %s39 = sadd.s32 1, %s35
    $region7: #{tpu_custom_call.1} parent=1 // loop_footer_branch
      %34 = sbr.rel target = $region3
    $region8: #{tpu_custom_call.1} parent=1 // loop_exit
      _
    %2424 = vsyncpa [#allocation3], 1
    %s2425 = scalar_lea.sflag [#allocation3], 1
    %2426 = vsyncpa %s2425, 1
    %2427 = vsyncpa [#allocation6], 1
    %2428 = vsyncpa [#allocation9], 1
    %2429 = vsyncpa [#allocation12], 1
    %2430 = vsyncpa [#allocation15], 1
    %2431 = vsyncpa [#allocation18], 1
    %2432 = vsyncpa [#allocation4], 1
    %s2433 = scalar_lea.sflag [#allocation4], 1
    %2434 = vsyncpa %s2433, 1

</llo_original>
